<compile_context>
chip_gen: v7x
topology: tpu7x:2x2x1
jax: 0.10.0
libtpu: 0.0.40
codegen_flags: <defaults>
</compile_context>

<pallas_src>
import numpy as np
import jax
import jax.numpy as jnp
from jax.experimental import pallas as pl
from jax.experimental.pallas import tpu as pltpu

BN_EPS = 1e-5


# --------------------------------------------------------------------------- kernel
def _make_nfm_kernel(chunks, field_rows, row_in_chunk, D, chunk_cols):
    """chunks: tuple of tuples of field indices per 128-row vocab chunk.
    field_rows[f]: padded (16-aligned) row count of field f.
    row_in_chunk[f]: static row offset of field f inside its chunk.
    All metadata is static Python — the kernel is traced once per configuration."""

    def kernel(xT_ref, tab2T_ref, w1T_ref, b1_ref, w2T_ref, b2_ref,
               w3_ref, b3_ref, out_ref, mh_ref):
        # All activations are (features, TB): batch lives on the lane dimension.
        _, TB = xT_ref.shape
        x = xT_ref[...]                                      # (F, TB) int32, LOCAL ids

        # [sum_emb ; sum_emb_sq] accumulated in f32 across vocab chunks.
        both = jnp.zeros((2 * D, TB), jnp.float32)

        for c, fields in enumerate(chunks):
            used = 0
            for f in fields:
                r = field_rows[f]
                r0 = row_in_chunk[f]
                li = jax.lax.broadcasted_iota(jnp.int32, (r, TB), 0)
                # one-hot block for this field only (disjoint packed rows)
                blk = (li == x[f:f + 1, :]).astype(jnp.float32)
                mh_ref[r0:r0 + r, :] = blk.astype(jnp.bfloat16)
                used += r
            if used < chunk_cols:                            # keep pad rows NaN-free
                mh_ref[used:chunk_cols, :] = jnp.zeros(
                    (chunk_cols - used, TB), jnp.bfloat16)

            # one fused MXU pass per chunk over the stacked [table ; table^2] operand
            both = both + jnp.dot(
                tab2T_ref[:, c * chunk_cols:(c + 1) * chunk_cols], mh_ref[...],
                preferred_element_type=jnp.float32)          # (2D, TB)

        sum_e = both[:D, :]
        sum_sq = both[D:, :]
        cross = (0.5 * (sum_e * sum_e - sum_sq)).astype(jnp.bfloat16)   # (D, TB)

        # MLP (BN0/BN1 folded into w1/b1, BN2 folded into w2/b2; dropout = identity)
        h = jnp.dot(w1T_ref[...], cross,
                    preferred_element_type=jnp.float32) + b1_ref[...]   # (H1, TB)
        h = jnp.maximum(h, 0.0)
        h = jnp.dot(w2T_ref[...], h.astype(jnp.bfloat16),
                    preferred_element_type=jnp.float32) + b2_ref[...]   # (H2, TB)
        h = jnp.maximum(h, 0.0)

        # final Linear(H2 -> 1): VPU multiply + sublane reduce (skip the N=1 MXU pass)
        logit = jnp.sum(w3_ref[...] * h, axis=0, keepdims=True) + b3_ref[...]  # (1, TB)
        out_ref[...] = jax.nn.sigmoid(logit)                 # lane-dense store

    return kernel


# --------------------------------------------------------------------------- wrapper
def nfm_forward(x, prep, *, block_b=256):
    """x: (B, F) int32 local per-field indices; returns (B,) float32 probabilities."""
    tab2T, w1T, b1c, w2T, b2c, w3c, b3s = prep["operands"]
    meta = prep["meta"]
    B, F = x.shape
    TB = block_b
    assert TB % 128 == 0, "batch tile must be lane-aligned"

    # Batch on the lane axis; pad batch to a multiple of the tile.
    xT = x.T.astype(jnp.int32)                               # (F, B)
    Bp = pl.cdiv(B, TB) * TB
    if Bp != B:
        xT = jnp.pad(xT, ((0, 0), (0, Bp - B)))

    kernel = _make_nfm_kernel(meta["chunks"], meta["field_rows"],
                              meta["row_in_chunk"], meta["D"], meta["chunk_cols"])

    const = lambda a: pl.BlockSpec(a.shape, lambda i: (0, 0))   # VMEM-resident operand

    D, H1, H2 = meta["D"], w1T.shape[0], w2T.shape[0]
    Vp = tab2T.shape[1]
    flops = int(Bp) * (2 * (2 * D) * Vp + 2 * D * H1 + 2 * H1 * H2 + 2 * H2)
    param_bytes = int(sum(int(a.size) * a.dtype.itemsize
                          for a in (tab2T, w1T, b1c, w2T, b2c, w3c, b3s)))
    cost = pl.CostEstimate(flops=flops, transcendentals=int(Bp),
                           bytes_accessed=int(xT.size) * 4 + int(Bp) * 4 + param_bytes)

    out = pl.pallas_call(
        kernel,
        out_shape=jax.ShapeDtypeStruct((1, Bp), jnp.float32),
        grid=(Bp // TB,),
        in_specs=[
            pl.BlockSpec((F, TB), lambda i: (0, i)),         # streamed per batch tile
            const(tab2T),
            const(w1T), const(b1c),
            const(w2T), const(b2c),
            const(w3c), const(b3s),
        ],
        out_specs=pl.BlockSpec((1, TB), lambda i: (0, i)),
        scratch_shapes=[pltpu.VMEM((meta["chunk_cols"], TB), jnp.bfloat16)],
        compiler_params=pltpu.CompilerParams(
            dimension_semantics=("parallel",)),
        cost_estimate=cost,
    )(xT, tab2T, w1T, b1c, w2T, b2c, w3c, b3s)
    return out[0, :B]


# ------------------------------------------------------- one-time parameter transform
def fold_and_prepare(raw, field_dims, *, chunk_cols=128, field_row_align=16):
    """Fold eval-mode BatchNorms into Linears, pack the embedding table into
    16-row-aligned per-field blocks grouped into 128-column chunks, stack
    [table ; table^2], and cast MXU operands to bf16."""
    (table, bn0, w1, b1, bn1, w2, b2, bn2, w3, b3) = raw
    V, D = table.shape
    F = len(field_dims)

    def scale_shift(p):                      # p rows: [gamma, beta, mean, var]
        g, be, m, v = p[0], p[1], p[2], p[3]
        s = g * jax.lax.rsqrt(v + BN_EPS)
        return s, be - m * s

    s0, t0 = scale_shift(bn0)
    s1, t1 = scale_shift(bn1)
    s2, t2 = scale_shift(bn2)

    w1f = (s0[:, None] * w1) * s1[None, :]   # BN0 (input cols) + BN1 (output cols)
    b1f = (t0 @ w1 + b1) * s1 + t1
    w2f = w2 * s2[None, :]                   # BN2 (output cols)
    b2f = b2 * s2 + t2

    # ---- packed layout: field blocks padded to 16 rows, greedily grouped into chunks
    field_rows = [int(-(-d // field_row_align) * field_row_align) for d in field_dims]
    assert max(field_rows) <= chunk_cols, \
        "per-field vocab too large for the one-hot-matmul path"
    chunks, row_in_chunk, packed_off = [], [0] * F, [0] * F
    cur, cur_rows = [], 0
    for f in range(F):
        r = field_rows[f]
        if cur_rows + r > chunk_cols:
            chunks.append(tuple(cur))
            cur, cur_rows = [], 0
        row_in_chunk[f] = cur_rows
        cur.append(f)
        cur_rows += r
    chunks.append(tuple(cur))
    n_chunks = len(chunks)
    Vp = n_chunks * chunk_cols
    for c, fs in enumerate(chunks):
        for f in fs:
            packed_off[f] = c * chunk_cols + row_in_chunk[f]

    # ---- stacked [table ; table^2], packed; square the ORIGINAL f32 table first
    offsets = np.concatenate(([0], np.cumsum(field_dims)[:-1])).astype(np.int64)
    table_np = np.asarray(table, np.float32)
    tab2 = np.zeros((Vp, 2 * D), np.float32)
    for f in range(F):
        src = table_np[offsets[f]:offsets[f] + field_dims[f]]
        dst = packed_off[f]
        tab2[dst:dst + field_dims[f], :D] = src
        tab2[dst:dst + field_dims[f], D:] = src * src
    tab2T = jnp.asarray(tab2.T, jnp.bfloat16)                 # (2D, Vp) bf16

    operands = (
        tab2T,
        jnp.asarray(w1f.T, jnp.bfloat16),                     # (H1, D)  bf16
        jnp.asarray(b1f, jnp.float32).reshape(-1, 1),         # (H1, 1)
        jnp.asarray(w2f.T, jnp.bfloat16),                     # (H2, H1) bf16
        jnp.asarray(b2f, jnp.float32).reshape(-1, 1),         # (H2, 1)
        jnp.asarray(w3, jnp.float32),                         # (H2, 1)  (VPU path -> f32)
        jnp.asarray(b3, jnp.float32).reshape(1, 1),           # (1, 1)
    )
    meta = dict(chunks=tuple(chunks), field_rows=tuple(field_rows),
                row_in_chunk=tuple(row_in_chunk),
                packed_off=np.asarray(packed_off, np.int32),
                D=int(D), chunk_cols=int(chunk_cols))
    return {"operands": operands, "meta": meta}


# --------------------------------------------------------------------------- reference
def nfm_reference(x, prep):
    """Pure-JAX reference using the same prepared (folded / packed / bf16) parameters."""
    tab2T, w1T, b1c, w2T, b2c, w3c, b3s = prep["operands"]
    meta = prep["meta"]
    D = meta["D"]
    packed_off = jnp.asarray(meta["packed_off"], jnp.int32)

    tab2 = tab2T.astype(jnp.float32).T                        # (Vp, 2D)
    g = tab2[x + packed_off[None, :]]                         # (B, F, 2D)
    s = g.sum(axis=1)                                         # (B, 2D)
    sum_e, sum_sq = s[:, :D], s[:, D:]
    cross = 0.5 * (sum_e * sum_e - sum_sq)

    h = jnp.dot(cross.astype(jnp.bfloat16), w1T.T,
                preferred_element_type=jnp.float32) + b1c[:, 0]
    h = jnp.maximum(h, 0.0)
    h = jnp.dot(h.astype(jnp.bfloat16), w2T.T,
                preferred_element_type=jnp.float32) + b2c[:, 0]
    h = jnp.maximum(h, 0.0)
    logit = h @ w3c + b3s[0]
    return jax.nn.sigmoid(logit[:, 0])


# --------------------------------------------------------------------------- params
def make_raw_params(key, field_dims, embed_dim, mlp_dims):
    V = int(np.sum(field_dims))
    ks = jax.random.split(key, 8)

    def bn_params(k, dim):
        k1, k2, k3, k4 = jax.random.split(k, 4)
        gamma = 1.0 + 0.1 * jax.random.normal(k1, (dim,), jnp.float32)
        beta = 0.1 * jax.random.normal(k2, (dim,), jnp.float32)
        mean = 0.1 * jax.random.normal(k3, (dim,), jnp.float32)
        var = jax.random.uniform(k4, (dim,), jnp.float32, minval=0.5, maxval=1.5)
        return jnp.stack([gamma, beta, mean, var], axis=0)    # (4, dim)

    def linear(k, din, dout):
        k1, k2 = jax.random.split(k)
        w = jax.random.normal(k1, (din, dout), jnp.float32) / np.sqrt(din)
        b = 0.01 * jax.random.normal(k2, (dout,), jnp.float32)
        return w, b

    table = 0.1 * jax.random.normal(ks[0], (V, embed_dim), jnp.float32)
    bn0 = bn_params(ks[1], embed_dim)
    w1, b1 = linear(ks[2], embed_dim, mlp_dims[0])
    bn1 = bn_params(ks[3], mlp_dims[0])
    w2, b2 = linear(ks[4], mlp_dims[0], mlp_dims[1])
    bn2 = bn_params(ks[5], mlp_dims[1])
    w3, b3 = linear(ks[6], mlp_dims[1], 1)
    return (table, bn0, w1, b1, bn1, w2, b2, bn2, w3, b3)


if __name__ == "__main__":
    key = jax.random.PRNGKey(0)
    field_dims = [7, 11, 13, 17, 19, 23, 29, 31]     # 8 fields, total vocab = 150
    embed_dim = 32
    mlp_dims = (64, 32)
    dropouts = (0.2, 0.2)                            # eval mode -> dropout is identity
    B = 512                                          # two 256-wide batch tiles

    kx, kp = jax.random.split(key)
    x = jax.random.randint(kx, (B, len(field_dims)), 0,
                           jnp.asarray(field_dims, dtype=jnp.int32), dtype=jnp.int32)
    raw = make_raw_params(kp, field_dims, embed_dim, mlp_dims)
    prep = fold_and_prepare(raw, field_dims)         # one-time: BN fold + pack + bf16

    out = jax.block_until_ready(nfm_forward(x, prep, block_b=256))
    ref = jax.block_until_ready(nfm_reference(x, prep))

    assert out.shape == (B,)
    np.testing.assert_allclose(np.asarray(out), np.asarray(ref), rtol=1e-4, atol=1e-4)
    print("KERNEL_OK")
</pallas_src>

<mosaic_0001>
module attributes {stable_mosaic.version = 11 : i64} {
  func.func @kernel(%arg0: i32, %arg1: memref<8x256xi32, #tpu.memory_space<vmem>>, %arg2: memref<64x256xbf16, #tpu.memory_space<vmem>>, %arg3: memref<64x32xbf16, #tpu.memory_space<vmem>>, %arg4: memref<64x1xf32, #tpu.memory_space<vmem>>, %arg5: memref<32x64xbf16, #tpu.memory_space<vmem>>, %arg6: memref<32x1xf32, #tpu.memory_space<vmem>>, %arg7: memref<32x1xf32, #tpu.memory_space<vmem>>, %arg8: memref<1x1xf32, #tpu.memory_space<vmem>>, %arg9: memref<1x256xf32, #tpu.memory_space<vmem>>, %arg10: memref<128x256xbf16, #tpu.memory_space<vmem>>) attributes {dimension_semantics = [#tpu.dimension_semantics<parallel>], iteration_bounds = array<i64: 2>, scalar_prefetch = 0 : i64, scratch_operands = 1 : i64, tpu.core_type = #tpu.core_type<tc>, window_params = [{transform_indices = @transform_0, window_bounds = array<i64: 8, 256>}, {pipeline_mode = #tpu.pipeline_mode<synchronous>, transform_indices = @transform_1, window_bounds = array<i64: 64, 256>}, {pipeline_mode = #tpu.pipeline_mode<synchronous>, transform_indices = @transform_2, window_bounds = array<i64: 64, 32>}, {pipeline_mode = #tpu.pipeline_mode<synchronous>, transform_indices = @transform_3, window_bounds = array<i64: 64, 1>}, {pipeline_mode = #tpu.pipeline_mode<synchronous>, transform_indices = @transform_4, window_bounds = array<i64: 32, 64>}, {pipeline_mode = #tpu.pipeline_mode<synchronous>, transform_indices = @transform_5, window_bounds = array<i64: 32, 1>}, {pipeline_mode = #tpu.pipeline_mode<synchronous>, transform_indices = @transform_6, window_bounds = array<i64: 32, 1>}, {pipeline_mode = #tpu.pipeline_mode<synchronous>, transform_indices = @transform_7, window_bounds = array<i64: 1, 1>}, {transform_indices = @transform_8, window_bounds = array<i64: 1, 256>}]} {
    %c0 = arith.constant 0 : index
    %c0_0 = arith.constant 0 : index
    %0 = vector.load %arg1[%c0, %c0_0] : memref<8x256xi32, #tpu.memory_space<vmem>>, vector<8x256xi32>
    %cst = arith.constant 0.000000e+00 : f32
    %1 = vector.broadcast %cst : f32 to vector<64x256xf32>
    %2 = tpu.iota {dimensions = array<i32: 0>} : vector<16x256xi32>
    %3 = vector.extract_strided_slice %0 {offsets = [0, 0], sizes = [1, 256], strides = [1, 1]} : vector<8x256xi32> to vector<1x256xi32>
    %4 = vector.broadcast %3 : vector<1x256xi32> to vector<16x256xi32>
    %5 = arith.cmpi eq, %2, %4 : vector<16x256xi32>
    %6 = arith.extui %5 : vector<16x256xi1> to vector<16x256xi32>
    %7 = arith.sitofp %6 : vector<16x256xi32> to vector<16x256xf32>
    %8 = arith.truncf %7 : vector<16x256xf32> to vector<16x256xbf16>
    %c0_1 = arith.constant 0 : index
    %c0_2 = arith.constant 0 : index
    %9 = vector.load %arg10[%c0_1, %c0_2] : memref<128x256xbf16, #tpu.memory_space<vmem>>, vector<16x256xbf16>
    tpu.vector_store %arg10[%c0_1, %c0_2], %8 {strides = array<i32>} : memref<128x256xbf16, #tpu.memory_space<vmem>>, vector<16x256xbf16>,
    %10 = tpu.iota {dimensions = array<i32: 0>} : vector<16x256xi32>
    %11 = vector.extract_strided_slice %0 {offsets = [1, 0], sizes = [1, 256], strides = [1, 1]} : vector<8x256xi32> to vector<1x256xi32>
    %12 = vector.broadcast %11 : vector<1x256xi32> to vector<16x256xi32>
    %13 = arith.cmpi eq, %10, %12 : vector<16x256xi32>
    %14 = arith.extui %13 : vector<16x256xi1> to vector<16x256xi32>
    %15 = arith.sitofp %14 : vector<16x256xi32> to vector<16x256xf32>
    %16 = arith.truncf %15 : vector<16x256xf32> to vector<16x256xbf16>
    %c16 = arith.constant 16 : index
    %c0_3 = arith.constant 0 : index
    %17 = vector.load %arg10[%c16, %c0_3] : memref<128x256xbf16, #tpu.memory_space<vmem>>, vector<16x256xbf16>
    tpu.vector_store %arg10[%c16, %c0_3], %16 {strides = array<i32>} : memref<128x256xbf16, #tpu.memory_space<vmem>>, vector<16x256xbf16>,
    %18 = tpu.iota {dimensions = array<i32: 0>} : vector<16x256xi32>
    %19 = vector.extract_strided_slice %0 {offsets = [2, 0], sizes = [1, 256], strides = [1, 1]} : vector<8x256xi32> to vector<1x256xi32>
    %20 = vector.broadcast %19 : vector<1x256xi32> to vector<16x256xi32>
    %21 = arith.cmpi eq, %18, %20 : vector<16x256xi32>
    %22 = arith.extui %21 : vector<16x256xi1> to vector<16x256xi32>
    %23 = arith.sitofp %22 : vector<16x256xi32> to vector<16x256xf32>
    %24 = arith.truncf %23 : vector<16x256xf32> to vector<16x256xbf16>
    %c32 = arith.constant 32 : index
    %c0_4 = arith.constant 0 : index
    %25 = vector.load %arg10[%c32, %c0_4] : memref<128x256xbf16, #tpu.memory_space<vmem>>, vector<16x256xbf16>
    tpu.vector_store %arg10[%c32, %c0_4], %24 {strides = array<i32>} : memref<128x256xbf16, #tpu.memory_space<vmem>>, vector<16x256xbf16>,
    %26 = tpu.iota {dimensions = array<i32: 0>} : vector<32x256xi32>
    %27 = vector.extract_strided_slice %0 {offsets = [3, 0], sizes = [1, 256], strides = [1, 1]} : vector<8x256xi32> to vector<1x256xi32>
    %28 = vector.broadcast %27 : vector<1x256xi32> to vector<32x256xi32>
    %29 = arith.cmpi eq, %26, %28 : vector<32x256xi32>
    %30 = arith.extui %29 : vector<32x256xi1> to vector<32x256xi32>
    %31 = arith.sitofp %30 : vector<32x256xi32> to vector<32x256xf32>
    %32 = arith.truncf %31 : vector<32x256xf32> to vector<32x256xbf16>
    %c48 = arith.constant 48 : index
    %c0_5 = arith.constant 0 : index
    %33 = vector.load %arg10[%c48, %c0_5] : memref<128x256xbf16, #tpu.memory_space<vmem>>, vector<32x256xbf16>
    tpu.vector_store %arg10[%c48, %c0_5], %32 {strides = array<i32>} : memref<128x256xbf16, #tpu.memory_space<vmem>>, vector<32x256xbf16>,
    %34 = tpu.iota {dimensions = array<i32: 0>} : vector<32x256xi32>
    %35 = vector.extract_strided_slice %0 {offsets = [4, 0], sizes = [1, 256], strides = [1, 1]} : vector<8x256xi32> to vector<1x256xi32>
    %36 = vector.broadcast %35 : vector<1x256xi32> to vector<32x256xi32>
    %37 = arith.cmpi eq, %34, %36 : vector<32x256xi32>
    %38 = arith.extui %37 : vector<32x256xi1> to vector<32x256xi32>
    %39 = arith.sitofp %38 : vector<32x256xi32> to vector<32x256xf32>
    %40 = arith.truncf %39 : vector<32x256xf32> to vector<32x256xbf16>
    %c80 = arith.constant 80 : index
    %c0_6 = arith.constant 0 : index
    %41 = vector.load %arg10[%c80, %c0_6] : memref<128x256xbf16, #tpu.memory_space<vmem>>, vector<32x256xbf16>
    tpu.vector_store %arg10[%c80, %c0_6], %40 {strides = array<i32>} : memref<128x256xbf16, #tpu.memory_space<vmem>>, vector<32x256xbf16>,
    %cst_7 = arith.constant 0.000000e+00 : bf16
    %42 = vector.broadcast %cst_7 : bf16 to vector<16x256xbf16>
    %c112 = arith.constant 112 : index
    %c0_8 = arith.constant 0 : index
    %43 = vector.load %arg10[%c112, %c0_8] : memref<128x256xbf16, #tpu.memory_space<vmem>>, vector<16x256xbf16>
    tpu.vector_store %arg10[%c112, %c0_8], %42 {strides = array<i32>} : memref<128x256xbf16, #tpu.memory_space<vmem>>, vector<16x256xbf16>,
    %c0_9 = arith.constant 0 : index
    %c0_10 = arith.constant 0 : index
    %44 = vector.load %arg2[%c0_9, %c0_10] : memref<64x256xbf16, #tpu.memory_space<vmem>>, vector<64x128xbf16>
    %c0_11 = arith.constant 0 : index
    %c0_12 = arith.constant 0 : index
    %45 = vector.load %arg10[%c0_11, %c0_12] : memref<128x256xbf16, #tpu.memory_space<vmem>>, vector<128x256xbf16>
    %cst_13 = arith.constant dense<0.000000e+00> : vector<64x256xf32>
    %46 = tpu.matmul %44, %45, %cst_13 {dimension_numbers = #tpu.dot_dimension_numbers<[1], [0], [0], [1], [0, 0, 1, 1], [], []>} : vector<64x128xbf16>, vector<128x256xbf16>, vector<64x256xf32> -> vector<64x256xf32>
    %47 = arith.addf %1, %46 : vector<64x256xf32>
    %48 = tpu.iota {dimensions = array<i32: 0>} : vector<32x256xi32>
    %49 = vector.extract_strided_slice %0 {offsets = [5, 0], sizes = [1, 256], strides = [1, 1]} : vector<8x256xi32> to vector<1x256xi32>
    %50 = vector.broadcast %49 : vector<1x256xi32> to vector<32x256xi32>
    %51 = arith.cmpi eq, %48, %50 : vector<32x256xi32>
    %52 = arith.extui %51 : vector<32x256xi1> to vector<32x256xi32>
    %53 = arith.sitofp %52 : vector<32x256xi32> to vector<32x256xf32>
    %54 = arith.truncf %53 : vector<32x256xf32> to vector<32x256xbf16>
    %c0_14 = arith.constant 0 : index
    %c0_15 = arith.constant 0 : index
    %55 = vector.load %arg10[%c0_14, %c0_15] : memref<128x256xbf16, #tpu.memory_space<vmem>>, vector<32x256xbf16>
    tpu.vector_store %arg10[%c0_14, %c0_15], %54 {strides = array<i32>} : memref<128x256xbf16, #tpu.memory_space<vmem>>, vector<32x256xbf16>,
    %56 = tpu.iota {dimensions = array<i32: 0>} : vector<32x256xi32>
    %57 = vector.extract_strided_slice %0 {offsets = [6, 0], sizes = [1, 256], strides = [1, 1]} : vector<8x256xi32> to vector<1x256xi32>
    %58 = vector.broadcast %57 : vector<1x256xi32> to vector<32x256xi32>
    %59 = arith.cmpi eq, %56, %58 : vector<32x256xi32>
    %60 = arith.extui %59 : vector<32x256xi1> to vector<32x256xi32>
    %61 = arith.sitofp %60 : vector<32x256xi32> to vector<32x256xf32>
    %62 = arith.truncf %61 : vector<32x256xf32> to vector<32x256xbf16>
    %c32_16 = arith.constant 32 : index
    %c0_17 = arith.constant 0 : index
    %63 = vector.load %arg10[%c32_16, %c0_17] : memref<128x256xbf16, #tpu.memory_space<vmem>>, vector<32x256xbf16>
    tpu.vector_store %arg10[%c32_16, %c0_17], %62 {strides = array<i32>} : memref<128x256xbf16, #tpu.memory_space<vmem>>, vector<32x256xbf16>,
    %64 = tpu.iota {dimensions = array<i32: 0>} : vector<32x256xi32>
    %65 = vector.extract_strided_slice %0 {offsets = [7, 0], sizes = [1, 256], strides = [1, 1]} : vector<8x256xi32> to vector<1x256xi32>
    %66 = vector.broadcast %65 : vector<1x256xi32> to vector<32x256xi32>
    %67 = arith.cmpi eq, %64, %66 : vector<32x256xi32>
    %68 = arith.extui %67 : vector<32x256xi1> to vector<32x256xi32>
    %69 = arith.sitofp %68 : vector<32x256xi32> to vector<32x256xf32>
    %70 = arith.truncf %69 : vector<32x256xf32> to vector<32x256xbf16>
    %c64 = arith.constant 64 : index
    %c0_18 = arith.constant 0 : index
    %71 = vector.load %arg10[%c64, %c0_18] : memref<128x256xbf16, #tpu.memory_space<vmem>>, vector<32x256xbf16>
    tpu.vector_store %arg10[%c64, %c0_18], %70 {strides = array<i32>} : memref<128x256xbf16, #tpu.memory_space<vmem>>, vector<32x256xbf16>,
    %cst_19 = arith.constant 0.000000e+00 : bf16
    %72 = vector.broadcast %cst_19 : bf16 to vector<32x256xbf16>
    %c96 = arith.constant 96 : index
    %c0_20 = arith.constant 0 : index
    %73 = vector.load %arg10[%c96, %c0_20] : memref<128x256xbf16, #tpu.memory_space<vmem>>, vector<32x256xbf16>
    tpu.vector_store %arg10[%c96, %c0_20], %72 {strides = array<i32>} : memref<128x256xbf16, #tpu.memory_space<vmem>>, vector<32x256xbf16>,
    %c0_21 = arith.constant 0 : index
    %c128 = arith.constant 128 : index
    %74 = vector.load %arg2[%c0_21, %c128] : memref<64x256xbf16, #tpu.memory_space<vmem>>, vector<64x128xbf16>
    %c0_22 = arith.constant 0 : index
    %c0_23 = arith.constant 0 : index
    %75 = vector.load %arg10[%c0_22, %c0_23] : memref<128x256xbf16, #tpu.memory_space<vmem>>, vector<128x256xbf16>
    %cst_24 = arith.constant dense<0.000000e+00> : vector<64x256xf32>
    %76 = tpu.matmul %74, %75, %cst_24 {dimension_numbers = #tpu.dot_dimension_numbers<[1], [0], [0], [1], [0, 0, 1, 1], [], []>} : vector<64x128xbf16>, vector<128x256xbf16>, vector<64x256xf32> -> vector<64x256xf32>
    %77 = arith.addf %47, %76 : vector<64x256xf32>
    %78 = vector.extract_strided_slice %77 {offsets = [0, 0], sizes = [32, 256], strides = [1, 1]} : vector<64x256xf32> to vector<32x256xf32>
    %79 = vector.extract_strided_slice %77 {offsets = [32, 0], sizes = [32, 256], strides = [1, 1]} : vector<64x256xf32> to vector<32x256xf32>
    %80 = arith.mulf %78, %78 : vector<32x256xf32>
    %81 = arith.subf %80, %79 : vector<32x256xf32>
    %cst_25 = arith.constant 5.000000e-01 : f32
    %82 = vector.broadcast %cst_25 : f32 to vector<32x256xf32>
    %83 = arith.mulf %82, %81 : vector<32x256xf32>
    %84 = arith.truncf %83 : vector<32x256xf32> to vector<32x256xbf16>
    %c0_26 = arith.constant 0 : index
    %c0_27 = arith.constant 0 : index
    %85 = vector.load %arg3[%c0_26, %c0_27] : memref<64x32xbf16, #tpu.memory_space<vmem>>, vector<64x32xbf16>
    %cst_28 = arith.constant dense<0.000000e+00> : vector<64x256xf32>
    %86 = tpu.matmul %85, %84, %cst_28 {dimension_numbers = #tpu.dot_dimension_numbers<[1], [0], [0], [1], [0, 0, 1, 1], [], []>} : vector<64x32xbf16>, vector<32x256xbf16>, vector<64x256xf32> -> vector<64x256xf32>
    %c0_29 = arith.constant 0 : index
    %c0_30 = arith.constant 0 : index
    %87 = vector.load %arg4[%c0_29, %c0_30] : memref<64x1xf32, #tpu.memory_space<vmem>>, vector<64x1xf32>
    %88 = vector.broadcast %87 : vector<64x1xf32> to vector<64x256xf32>
    %89 = arith.addf %86, %88 : vector<64x256xf32>
    %cst_31 = arith.constant 0.000000e+00 : f32
    %90 = vector.broadcast %cst_31 : f32 to vector<64x256xf32>
    %91 = arith.maximumf %89, %90 : vector<64x256xf32>
    %c0_32 = arith.constant 0 : index
    %c0_33 = arith.constant 0 : index
    %92 = vector.load %arg5[%c0_32, %c0_33] : memref<32x64xbf16, #tpu.memory_space<vmem>>, vector<32x64xbf16>
    %93 = arith.truncf %91 : vector<64x256xf32> to vector<64x256xbf16>
    %cst_34 = arith.constant dense<0.000000e+00> : vector<32x256xf32>
    %94 = tpu.matmul %92, %93, %cst_34 {dimension_numbers = #tpu.dot_dimension_numbers<[1], [0], [0], [1], [0, 0, 1, 1], [], []>} : vector<32x64xbf16>, vector<64x256xbf16>, vector<32x256xf32> -> vector<32x256xf32>
    %c0_35 = arith.constant 0 : index
    %c0_36 = arith.constant 0 : index
    %95 = vector.load %arg6[%c0_35, %c0_36] : memref<32x1xf32, #tpu.memory_space<vmem>>, vector<32x1xf32>
    %96 = vector.broadcast %95 : vector<32x1xf32> to vector<32x256xf32>
    %97 = arith.addf %94, %96 : vector<32x256xf32>
    %cst_37 = arith.constant 0.000000e+00 : f32
    %98 = vector.broadcast %cst_37 : f32 to vector<32x256xf32>
    %99 = arith.maximumf %97, %98 : vector<32x256xf32>
    %c0_38 = arith.constant 0 : index
    %c0_39 = arith.constant 0 : index
    %100 = vector.load %arg7[%c0_38, %c0_39] : memref<32x1xf32, #tpu.memory_space<vmem>>, vector<32x1xf32>
    %101 = vector.broadcast %100 : vector<32x1xf32> to vector<32x256xf32>
    %102 = arith.mulf %101, %99 : vector<32x256xf32>
    %cst_40 = arith.constant dense<0.000000e+00> : vector<256xf32>
    %103 = vector.multi_reduction <add>, %102, %cst_40 [0] : vector<32x256xf32> to vector<256xf32>
    %104 = vector.shape_cast %103 : vector<256xf32> to vector<1x256xf32>
    %c0_41 = arith.constant 0 : index
    %c0_42 = arith.constant 0 : index
    %105 = vector.load %arg8[%c0_41, %c0_42] : memref<1x1xf32, #tpu.memory_space<vmem>>, vector<1x1xf32>
    %106 = vector.broadcast %105 : vector<1x1xf32> to vector<1x256xf32>
    %107 = arith.addf %104, %106 : vector<1x256xf32>
    %108 = arith.negf %107 : vector<1x256xf32>
    %109 = math.exp %108 : vector<1x256xf32>
    %cst_43 = arith.constant 1.000000e+00 : f32
    %110 = vector.broadcast %cst_43 : f32 to vector<1x256xf32>
    %111 = arith.addf %110, %109 : vector<1x256xf32>
    %112 = arith.divf %110, %111 : vector<1x256xf32>
    %c0_44 = arith.constant 0 : index
    %c0_45 = arith.constant 0 : index
    %113 = vector.load %arg9[%c0_44, %c0_45] : memref<1x256xf32, #tpu.memory_space<vmem>>, vector<1x256xf32>
    tpu.vector_store %arg9[%c0_44, %c0_45], %112 {strides = array<i32>} : memref<1x256xf32, #tpu.memory_space<vmem>>, vector<1x256xf32>,
    return
  }
  func.func @transform_0(%arg0: i32) -> (i32, i32) {
    %c0_i32 = arith.constant 0 : i32
    %c0_i32_0 = arith.constant 0 : i32
    return %c0_i32, %arg0 : i32, i32
  }
  func.func @transform_1(%arg0: i32) -> (i32, i32) {
    %c0_i32 = arith.constant 0 : i32
    %c0_i32_0 = arith.constant 0 : i32
    %c0_i32_1 = arith.constant 0 : i32
    return %c0_i32, %c0_i32_0 : i32, i32
  }
  func.func @transform_2(%arg0: i32) -> (i32, i32) {
    %c0_i32 = arith.constant 0 : i32
    %c0_i32_0 = arith.constant 0 : i32
    %c0_i32_1 = arith.constant 0 : i32
    return %c0_i32, %c0_i32_0 : i32, i32
  }
  func.func @transform_3(%arg0: i32) -> (i32, i32) {
    %c0_i32 = arith.constant 0 : i32
    %c0_i32_0 = arith.constant 0 : i32
    %c0_i32_1 = arith.constant 0 : i32
    return %c0_i32, %c0_i32_0 : i32, i32
  }
  func.func @transform_4(%arg0: i32) -> (i32, i32) {
    %c0_i32 = arith.constant 0 : i32
    %c0_i32_0 = arith.constant 0 : i32
    %c0_i32_1 = arith.constant 0 : i32
    return %c0_i32, %c0_i32_0 : i32, i32
  }
  func.func @transform_5(%arg0: i32) -> (i32, i32) {
    %c0_i32 = arith.constant 0 : i32
    %c0_i32_0 = arith.constant 0 : i32
    %c0_i32_1 = arith.constant 0 : i32
    return %c0_i32, %c0_i32_0 : i32, i32
  }
  func.func @transform_6(%arg0: i32) -> (i32, i32) {
    %c0_i32 = arith.constant 0 : i32
    %c0_i32_0 = arith.constant 0 : i32
    %c0_i32_1 = arith.constant 0 : i32
    return %c0_i32, %c0_i32_0 : i32, i32
  }
  func.func @transform_7(%arg0: i32) -> (i32, i32) {
    %c0_i32 = arith.constant 0 : i32
    %c0_i32_0 = arith.constant 0 : i32
    %c0_i32_1 = arith.constant 0 : i32
    return %c0_i32, %c0_i32_0 : i32, i32
  }
  func.func @transform_8(%arg0: i32) -> (i32, i32) {
    %c0_i32 = arith.constant 0 : i32
    %c0_i32_0 = arith.constant 0 : i32
    return %c0_i32, %arg0 : i32, i32
  }
}

</mosaic_0001>

<llo_original>
// kernel: tpu_custom_call.1
$region0: #{tpu_custom_call.1}
  #allocation0 [shape = 'u32[]', space=smem, size = 0x4, offset = 0x4, fixed_abs, tag = 'smem constant byte address 0x4 - core index']
  #allocation1 [shape = 'u32[144,128]{1,0:T(1,128)}', space=vmem, size = 0x12000, scoped, tag = 'internal scratch']
  #allocation2 [shape = 'bf16[128,256]{1,0:T(16,128)(2,1)}', space=vmem, size = 0x10000, scoped, tag = 'scratch operand']
  #allocation3 [shape = 'f32[1,1]{1,0:T(1,128)S(1)}', space=vmem, size = 0x200, scoped, tag = 'scoped memory for tpu_custom_call.1']
  %s0 = inlined_call_operand.vmem [shape: s32[8,512], index: 0, kind: input, shape index: {}]
  %s1 = inlined_call_operand.vmem [shape: bf16[64,256], index: 1, kind: input, shape index: {}]
  %s2 = inlined_call_operand.vmem [shape: bf16[64,32], index: 2, kind: input, shape index: {}]
  %s3 = inlined_call_operand.vmem [shape: f32[64,1], index: 3, kind: input, shape index: {}]
  %s4 = inlined_call_operand.vmem [shape: bf16[32,64], index: 4, kind: input, shape index: {}]
  %s5 = inlined_call_operand.vmem [shape: f32[32,1], index: 5, kind: input, shape index: {}]
  %s6 = inlined_call_operand.vmem [shape: f32[32,1], index: 6, kind: input, shape index: {}]
  %s7 = inlined_call_operand.<no memory space> [shape: f32[1,1], index: 7, kind: input, shape index: {}]
  %s8 = inlined_call_operand.hbm [shape: f32[1,512], index: 8, kind: output, shape index: {}]
  %s9 = sld [smem:[#allocation0]]
  $region65: #{tpu_custom_call.1} parent=0
    _
  %s11 = ssub.s32 1, %s9
  %s12 = scalar_select 0, %s11, %s9
  %v13 = vstv %s7
  %14 = vst [vmem:[#allocation3] sm:$0x1] %v13
  $region1: #{tpu_custom_call.1} parent=0
    #allocation4 [shape = 'u8[2048]{0}', space=vmem, size = 0x800, scoped, tag = 'output window, operand 0']
    #allocation5 [shape = 's32[2]{0}', space=sflag, size = 0x8, scoped, tag = 'scoped memory for tpu_custom_call.1']
    %15 = vsyncpa [#allocation5], 0
    %s16 = scalar_lea.sflag [#allocation5], 1
    %17 = vsyncpa %s16, 0
    loop: start=0, step=1, limit=4
    $region2: #{tpu_custom_call.1} parent=1 // loop_pre_header
      _
    $region3: #{tpu_custom_call.1} parent=1 // loop_header
      %s19 = sphi 0, %s23
      %p20 = scmp.ge.s32.totalorder %s19, 4
      %s29 = sphi 0, %s31
      %s32 = sphi 0, %s29
      %s33 = sphi 0, %s32
      %s49 = sphi 0, %s33
      %s53 = sphi 0, %s53
      %s55 = sphi 0, %s53
      %s56 = sphi 0, %s55
      %s70 = sphi 0, %s56
      %s74 = sphi 0, %s74
      %s76 = sphi 0, %s74
      %s77 = sphi 0, %s76
      %s91 = sphi 0, %s77
      %s95 = sphi 0, %s95
      %s97 = sphi 0, %s95
      %s98 = sphi 0, %s97
      %s112 = sphi 0, %s98
      %s116 = sphi 0, %s116
      %s118 = sphi 0, %s116
      %s119 = sphi 0, %s118
      %s133 = sphi 0, %s119
      %s137 = sphi 0, %s137
      %s139 = sphi 0, %s137
      %s140 = sphi 0, %s139
      %s154 = sphi 0, %s140
      %s158 = sphi 0, %s158
      %s160 = sphi 0, %s158
      %s161 = sphi 0, %s160
      %s175 = sphi 0, %s161
      %s179 = sphi 0, %s179
      %s181 = sphi 0, %s179
      %s182 = sphi 0, %s181
      %s196 = sphi 0, %s182
      %s202 = sphi 0, %s204
      %s205 = sphi 0, %s202
      %s206 = sphi 0, %s205
      %s222 = sphi 0, %s206
    $region4: #{tpu_custom_call.1} parent=1 // loop_header_branch
      %22 = sbr.rel (%p20) target = $region8
    $region5: #{tpu_custom_call.1} parent=1 // loop_body
      %s24 = ssub.s32 %s19, 1
      %s25 = ssub.s32 %s19, 2
      %s26 = sadd.s32 %s19, 1
      %s27 = ssub.s32 %s19, %s26
      %p28 = scmp.eq.s32.totalorder %s27, 0
      %s30 = sadd.s32 %s29, 1
      %s31 = scalar_select %p28, %s29, %s30
      %p34 = pneg %p28
      %p35 = scmp.eq.s32.totalorder %s19, 1
      %p36 = por %p34, %p35
      %p37 = scmp.ne.s32.totalorder %s29, %s32
      %p38 = scmp.eq.s32.totalorder %s19, 0
      %p39 = por %p37, %p38
      %p40 = scmp.ne.s32.totalorder %s29, %s32
      %p41 = scmp.eq.s32.totalorder %s24, 1
      %p42 = por %p40, %p41
      %p43 = scmp.ne.s32.totalorder %s32, %s33
      %p44 = scmp.eq.s32.totalorder %s24, 0
      %p45 = por %p43, %p44
      %p46 = scmp.ne.s32.totalorder %s32, %s33
      %p47 = scmp.eq.s32.totalorder %s25, 1
      %p48 = por %p46, %p47
      %p50 = scmp.ne.s32.totalorder %s33, %s49
      %p51 = scmp.eq.s32.totalorder %s25, 0
      %p52 = por %p50, %p51
      %s54 = sadd.s32 %s53, 1
      %p57 = scmp.eq.s32.totalorder %s19, 1
      %p58 = scmp.ne.s32.totalorder %s53, %s55
      %p59 = scmp.eq.s32.totalorder %s19, 0
      %p60 = por %p58, %p59
      %p61 = scmp.ne.s32.totalorder %s53, %s55
      %p62 = scmp.eq.s32.totalorder %s24, 1
      %p63 = por %p61, %p62
      %p64 = scmp.ne.s32.totalorder %s55, %s56
      %p65 = scmp.eq.s32.totalorder %s24, 0
      %p66 = por %p64, %p65
      %p67 = scmp.ne.s32.totalorder %s55, %s56
      %p68 = scmp.eq.s32.totalorder %s25, 1
      %p69 = por %p67, %p68
      %p71 = scmp.ne.s32.totalorder %s56, %s70
      %p72 = scmp.eq.s32.totalorder %s25, 0
      %p73 = por %p71, %p72
      %s75 = sadd.s32 %s74, 1
      %p78 = scmp.eq.s32.totalorder %s19, 1
      %p79 = scmp.ne.s32.totalorder %s74, %s76
      %p80 = scmp.eq.s32.totalorder %s19, 0
      %p81 = por %p79, %p80
      %p82 = scmp.ne.s32.totalorder %s74, %s76
      %p83 = scmp.eq.s32.totalorder %s24, 1
      %p84 = por %p82, %p83
      %p85 = scmp.ne.s32.totalorder %s76, %s77
      %p86 = scmp.eq.s32.totalorder %s24, 0
      %p87 = por %p85, %p86
      %p88 = scmp.ne.s32.totalorder %s76, %s77
      %p89 = scmp.eq.s32.totalorder %s25, 1
      %p90 = por %p88, %p89
      %p92 = scmp.ne.s32.totalorder %s77, %s91
      %p93 = scmp.eq.s32.totalorder %s25, 0
      %p94 = por %p92, %p93
      %s96 = sadd.s32 %s95, 1
      %p99 = scmp.eq.s32.totalorder %s19, 1
      %p100 = scmp.ne.s32.totalorder %s95, %s97
      %p101 = scmp.eq.s32.totalorder %s19, 0
      %p102 = por %p100, %p101
      %p103 = scmp.ne.s32.totalorder %s95, %s97
      %p104 = scmp.eq.s32.totalorder %s24, 1
      %p105 = por %p103, %p104
      %p106 = scmp.ne.s32.totalorder %s97, %s98
      %p107 = scmp.eq.s32.totalorder %s24, 0
      %p108 = por %p106, %p107
      %p109 = scmp.ne.s32.totalorder %s97, %s98
      %p110 = scmp.eq.s32.totalorder %s25, 1
      %p111 = por %p109, %p110
      %p113 = scmp.ne.s32.totalorder %s98, %s112
      %p114 = scmp.eq.s32.totalorder %s25, 0
      %p115 = por %p113, %p114
      %s117 = sadd.s32 %s116, 1
      %p120 = scmp.eq.s32.totalorder %s19, 1
      %p121 = scmp.ne.s32.totalorder %s116, %s118
      %p122 = scmp.eq.s32.totalorder %s19, 0
      %p123 = por %p121, %p122
      %p124 = scmp.ne.s32.totalorder %s116, %s118
      %p125 = scmp.eq.s32.totalorder %s24, 1
      %p126 = por %p124, %p125
      %p127 = scmp.ne.s32.totalorder %s118, %s119
      %p128 = scmp.eq.s32.totalorder %s24, 0
      %p129 = por %p127, %p128
      %p130 = scmp.ne.s32.totalorder %s118, %s119
      %p131 = scmp.eq.s32.totalorder %s25, 1
      %p132 = por %p130, %p131
      %p134 = scmp.ne.s32.totalorder %s119, %s133
      %p135 = scmp.eq.s32.totalorder %s25, 0
      %p136 = por %p134, %p135
      %s138 = sadd.s32 %s137, 1
      %p141 = scmp.eq.s32.totalorder %s19, 1
      %p142 = scmp.ne.s32.totalorder %s137, %s139
      %p143 = scmp.eq.s32.totalorder %s19, 0
      %p144 = por %p142, %p143
      %p145 = scmp.ne.s32.totalorder %s137, %s139
      %p146 = scmp.eq.s32.totalorder %s24, 1
      %p147 = por %p145, %p146
      %p148 = scmp.ne.s32.totalorder %s139, %s140
      %p149 = scmp.eq.s32.totalorder %s24, 0
      %p150 = por %p148, %p149
      %p151 = scmp.ne.s32.totalorder %s139, %s140
      %p152 = scmp.eq.s32.totalorder %s25, 1
      %p153 = por %p151, %p152
      %p155 = scmp.ne.s32.totalorder %s140, %s154
      %p156 = scmp.eq.s32.totalorder %s25, 0
      %p157 = por %p155, %p156
      %s159 = sadd.s32 %s158, 1
      %p162 = scmp.eq.s32.totalorder %s19, 1
      %p163 = scmp.ne.s32.totalorder %s158, %s160
      %p164 = scmp.eq.s32.totalorder %s19, 0
      %p165 = por %p163, %p164
      %p166 = scmp.ne.s32.totalorder %s158, %s160
      %p167 = scmp.eq.s32.totalorder %s24, 1
      %p168 = por %p166, %p167
      %p169 = scmp.ne.s32.totalorder %s160, %s161
      %p170 = scmp.eq.s32.totalorder %s24, 0
      %p171 = por %p169, %p170
      %p172 = scmp.ne.s32.totalorder %s160, %s161
      %p173 = scmp.eq.s32.totalorder %s25, 1
      %p174 = por %p172, %p173
      %p176 = scmp.ne.s32.totalorder %s161, %s175
      %p177 = scmp.eq.s32.totalorder %s25, 0
      %p178 = por %p176, %p177
      %s180 = sadd.s32 %s179, 1
      %p183 = scmp.eq.s32.totalorder %s19, 1
      %p184 = scmp.ne.s32.totalorder %s179, %s181
      %p185 = scmp.eq.s32.totalorder %s19, 0
      %p186 = por %p184, %p185
      %p187 = scmp.ne.s32.totalorder %s179, %s181
      %p188 = scmp.eq.s32.totalorder %s24, 1
      %p189 = por %p187, %p188
      %p190 = scmp.ne.s32.totalorder %s181, %s182
      %p191 = scmp.eq.s32.totalorder %s24, 0
      %p192 = por %p190, %p191
      %p193 = scmp.ne.s32.totalorder %s181, %s182
      %p194 = scmp.eq.s32.totalorder %s25, 1
      %p195 = por %p193, %p194
      %p197 = scmp.ne.s32.totalorder %s182, %s196
      %p198 = scmp.eq.s32.totalorder %s25, 0
      %p199 = por %p197, %p198
      %s200 = ssub.s32 %s19, %s26
      %p201 = scmp.eq.s32.totalorder %s200, 0
      %s203 = sadd.s32 %s202, 1
      %s204 = scalar_select %p201, %s202, %s203
      %p207 = pneg %p201
      %p208 = scmp.eq.s32.totalorder %s19, 1
      %p209 = por %p207, %p208
      %p210 = scmp.ne.s32.totalorder %s202, %s205
      %p211 = scmp.eq.s32.totalorder %s19, 0
      %p212 = por %p210, %p211
      %p213 = scmp.ne.s32.totalorder %s202, %s205
      %p214 = scmp.eq.s32.totalorder %s24, 1
      %p215 = por %p213, %p214
      %p216 = scmp.ne.s32.totalorder %s205, %s206
      %p217 = scmp.eq.s32.totalorder %s24, 0
      %p218 = por %p216, %p217
      %p219 = scmp.ne.s32.totalorder %s205, %s206
      %p220 = scmp.eq.s32.totalorder %s25, 1
      %p221 = por %p219, %p220
      %p223 = scmp.ne.s32.totalorder %s206, %s222
      %p224 = scmp.eq.s32.totalorder %s25, 0
      %p225 = por %p223, %p224
      %p226 = scmp.le.s32.totalorder 1, %s19
      %p227 = scmp.lt.s32.totalorder %s19, 3
      %p228 = pnand %p226, %p227
      %p229 = pneg %p228
      // Predicated region
      $region9: #{tpu_custom_call.1} parent=5 // pred_check
        _
      $region10: #{tpu_custom_call.1} parent=5 // pred_check_branch
        %231 = sbr.rel (%p228) target = $region12
      $region11: #{tpu_custom_call.1} parent=5 // pred_region
        %s232 = ssub.s32 %s19, 1
        // Predicated region
        $region13: #{tpu_custom_call.1} parent=11 // pred_check
          %p233 = pneg %p66
        $region14: #{tpu_custom_call.1} parent=11 // pred_check_branch
          %235 = sbr.rel (%p233) target = $region16
        $region15: #{tpu_custom_call.1} parent=11 // pred_region
          _
        $region16: #{tpu_custom_call.1} parent=11 // pred_fallthru
          _
        // Predicated region
        $region17: #{tpu_custom_call.1} parent=11 // pred_check
          %p236 = pneg %p87
        $region18: #{tpu_custom_call.1} parent=11 // pred_check_branch
          %238 = sbr.rel (%p236) target = $region20
        $region19: #{tpu_custom_call.1} parent=11 // pred_region
          _
        $region20: #{tpu_custom_call.1} parent=11 // pred_fallthru
          _
        // Predicated region
        $region21: #{tpu_custom_call.1} parent=11 // pred_check
          %p239 = pneg %p108
        $region22: #{tpu_custom_call.1} parent=11 // pred_check_branch
          %241 = sbr.rel (%p239) target = $region24
        $region23: #{tpu_custom_call.1} parent=11 // pred_region
          _
        $region24: #{tpu_custom_call.1} parent=11 // pred_fallthru
          _
        // Predicated region
        $region25: #{tpu_custom_call.1} parent=11 // pred_check
          %p242 = pneg %p129
        $region26: #{tpu_custom_call.1} parent=11 // pred_check_branch
          %244 = sbr.rel (%p242) target = $region28
        $region27: #{tpu_custom_call.1} parent=11 // pred_region
          _
        $region28: #{tpu_custom_call.1} parent=11 // pred_fallthru
          _
        // Predicated region
        $region29: #{tpu_custom_call.1} parent=11 // pred_check
          %p245 = pneg %p150
        $region30: #{tpu_custom_call.1} parent=11 // pred_check_branch
          %247 = sbr.rel (%p245) target = $region32
        $region31: #{tpu_custom_call.1} parent=11 // pred_region
          _
        $region32: #{tpu_custom_call.1} parent=11 // pred_fallthru
          _
        // Predicated region
        $region33: #{tpu_custom_call.1} parent=11 // pred_check
          %p248 = pneg %p171
        $region34: #{tpu_custom_call.1} parent=11 // pred_check_branch
          %250 = sbr.rel (%p248) target = $region36
        $region35: #{tpu_custom_call.1} parent=11 // pred_region
          _
        $region36: #{tpu_custom_call.1} parent=11 // pred_fallthru
          _
        // Predicated region
        $region37: #{tpu_custom_call.1} parent=11 // pred_check
          %p251 = pneg %p192
        $region38: #{tpu_custom_call.1} parent=11 // pred_check_branch
          %253 = sbr.rel (%p251) target = $region40
        $region39: #{tpu_custom_call.1} parent=11 // pred_region
          _
        $region40: #{tpu_custom_call.1} parent=11 // pred_fallthru
          _
      $region12: #{tpu_custom_call.1} parent=5 // pred_fallthru
        _
      %p254 = scmp.lt.s32.totalorder %s19, 2
      // Predicated region
      $region41: #{tpu_custom_call.1} parent=5 // pred_check
        %p255 = pneg %p254
      $region42: #{tpu_custom_call.1} parent=5 // pred_check_branch
        %257 = sbr.rel (%p255) target = $region44
      $region43: #{tpu_custom_call.1} parent=5 // pred_region
        // Predicated region
        $region45: #{tpu_custom_call.1} parent=43 // pred_check
          %p258 = pneg %p39
        $region46: #{tpu_custom_call.1} parent=43 // pred_check_branch
          %260 = sbr.rel (%p258) target = $region48
        $region47: #{tpu_custom_call.1} parent=43 // pred_region
          %s261 = smul.u32 2, %s19
          %p262 = scmp.lt.s32.totalorder %s261, 3
          %s263 = scalar_select %p262, %s261, 3
          %s264 = smul.addr %s263, 8
          %s265 = scalar_lea.vmem %s0, %s264
          %s266 = smul.u32 2, %s19
        $region48: #{tpu_custom_call.1} parent=43 // pred_fallthru
          _
      $region44: #{tpu_custom_call.1} parent=5 // pred_fallthru
        _
      %p267 = scmp.le.s32.totalorder 1, %s19
      %p268 = scmp.lt.s32.totalorder %s19, 3
      %p269 = pnand %p267, %p268
      %p270 = pneg %p269
      // Predicated region
      $region49: #{tpu_custom_call.1} parent=5 // pred_check
        _
      $region50: #{tpu_custom_call.1} parent=5 // pred_check_branch
        %272 = sbr.rel (%p269) target = $region52
      $region51: #{tpu_custom_call.1} parent=5 // pred_region
        %s273 = ssub.s32 %s19, 1
        %s274 = smul.u32 2, %s24
        %p275 = scmp.lt.s32.totalorder %s274, 3
        %s276 = scalar_select %p275, %s274, 3
        %s277 = smul.addr %s276, 8
        %s278 = scalar_lea.vmem %s0, %s277
        %p279 = pneg %p45
        %p280 = pneg %p42
        %p281 = pneg %p66
        %p282 = pneg %p63
        %p283 = pneg %p87
        %p284 = pneg %p84
        %p285 = pneg %p108
        %p286 = pneg %p105
        %p287 = pneg %p129
        %p288 = pneg %p126
        %p289 = pneg %p150
        %p290 = pneg %p147
        %p291 = pneg %p171
        %p292 = pneg %p168
        %p293 = pneg %p192
        %p294 = pneg %p189
        %p295 = pneg %p218
        %p296 = pneg %p215
        %s297 = sand.u32 %s205, 1
        %s298 = scalar_lea.sflag [#allocation5], %s297
        %s299 = sand.u32 %s205, 1
        %s300 = smul.addr %s299, 2
        %s301 = scalar_lea.vmem [#allocation4], %s300
        %s302 = smul.u32 2, %s24
        %p303 = scmp.lt.s32.totalorder %s302, 3
        %s304 = scalar_select %p303, %s302, 3
        %s305 = smul.addr %s304, 8
        %s306 = scalar_lea.vmem %s0, %s305
        %s307 = smul.u32 2, %s24
        %s308 = smul.u32 2, %s24
        %v310 = vld [vmem:[%s306] sm:$0xff]
        %v311 = vld [vmem:[%s306 + $0x8] sm:$0xff]
        %v312 = vlaneseq
        %v313 = vshrl.u32 %v312, 7
        %v314 = vadd.s32 %v313, 8
        %v315 = vlaneseq
        %v316 = vshrl.u32 %v315, 7
        %v317 = vsub.s32 0, %v316
        %v318 = vrot.slane %v310, %v317
        %v319 = vlaneseq
        %v320 = vshrl.u32 %v319, 7
        %v321 = vsub.s32 0, %v320
        %v322 = vrot.slane %v311, %v321
        %vm323 = vcmp.eq.s32.totalorder %v313, %v318
        %vm324 = vcmp.eq.s32.totalorder %v313, %v322
        %vm325 = vcmp.eq.s32.totalorder %v314, %v318
        %vm326 = vcmp.eq.s32.totalorder %v314, %v322
        %v327 = vsel %vm323, 1, 0
        %v328 = vsel %vm324, 1, 0
        %v329 = vsel %vm325, 1, 0
        %v330 = vsel %vm326, 1, 0
        %v331 = vcvt.s32.f32 %v327
        %v332 = vcvt.s32.f32 %v328
        %v333 = vcvt.s32.f32 %v329
        %v334 = vcvt.s32.f32 %v330
        %v335 = vpack.c.bf16 %v333, %v331
        %v336 = vpack.c.bf16 %v334, %v332
        %337 = vst [vmem:[#allocation2] sm:$0xff] %v335
        %338 = vst [vmem:[#allocation2 + $0x8] sm:$0xff] %v336
        %v339 = vlaneseq
        %v340 = vshrl.u32 %v339, 7
        %v341 = vsub.s32 1, %v340
        %v342 = vrot.slane %v310, %v341
        %v343 = vlaneseq
        %v344 = vshrl.u32 %v343, 7
        %v345 = vsub.s32 1, %v344
        %v346 = vrot.slane %v311, %v345
        %vm347 = vcmp.eq.s32.totalorder %v313, %v342
        %vm348 = vcmp.eq.s32.totalorder %v313, %v346
        %vm349 = vcmp.eq.s32.totalorder %v314, %v342
        %vm350 = vcmp.eq.s32.totalorder %v314, %v346
        %v351 = vsel %vm347, 1, 0
        %v352 = vsel %vm348, 1, 0
        %v353 = vsel %vm349, 1, 0
        %v354 = vsel %vm350, 1, 0
        %v355 = vcvt.s32.f32 %v351
        %v356 = vcvt.s32.f32 %v352
        %v357 = vcvt.s32.f32 %v353
        %v358 = vcvt.s32.f32 %v354
        %v359 = vpack.c.bf16 %v357, %v355
        %v360 = vpack.c.bf16 %v358, %v356
        %361 = vst [vmem:[#allocation2 + $0x10] sm:$0xff] %v359
        %362 = vst [vmem:[#allocation2 + $0x18] sm:$0xff] %v360
        %v363 = vlaneseq
        %v364 = vshrl.u32 %v363, 7
        %v365 = vsub.s32 2, %v364
        %v366 = vrot.slane %v310, %v365
        %v367 = vlaneseq
        %v368 = vshrl.u32 %v367, 7
        %v369 = vsub.s32 2, %v368
        %v370 = vrot.slane %v311, %v369
        %vm371 = vcmp.eq.s32.totalorder %v313, %v366
        %vm372 = vcmp.eq.s32.totalorder %v313, %v370
        %vm373 = vcmp.eq.s32.totalorder %v314, %v366
        %vm374 = vcmp.eq.s32.totalorder %v314, %v370
        %v375 = vsel %vm371, 1, 0
        %v376 = vsel %vm372, 1, 0
        %v377 = vsel %vm373, 1, 0
        %v378 = vsel %vm374, 1, 0
        %v379 = vcvt.s32.f32 %v375
        %v380 = vcvt.s32.f32 %v376
        %v381 = vcvt.s32.f32 %v377
        %v382 = vcvt.s32.f32 %v378
        %v383 = vpack.c.bf16 %v381, %v379
        %v384 = vpack.c.bf16 %v382, %v380
        %385 = vst [vmem:[#allocation2 + $0x20] sm:$0xff] %v383
        %386 = vst [vmem:[#allocation2 + $0x28] sm:$0xff] %v384
        %v387 = vadd.s32 %v313, 16
        %v388 = vadd.s32 %v313, 24
        %v389 = vlaneseq
        %v390 = vshrl.u32 %v389, 7
        %v391 = vsub.s32 3, %v390
        %v392 = vrot.slane %v310, %v391
        %v393 = vlaneseq
        %v394 = vshrl.u32 %v393, 7
        %v395 = vsub.s32 3, %v394
        %v396 = vrot.slane %v311, %v395
        %vm397 = vcmp.eq.s32.totalorder %v313, %v392
        %vm398 = vcmp.eq.s32.totalorder %v313, %v396
        %vm399 = vcmp.eq.s32.totalorder %v314, %v392
        %vm400 = vcmp.eq.s32.totalorder %v314, %v396
        %vm401 = vcmp.eq.s32.totalorder %v387, %v392
        %vm402 = vcmp.eq.s32.totalorder %v387, %v396
        %vm403 = vcmp.eq.s32.totalorder %v388, %v392
        %vm404 = vcmp.eq.s32.totalorder %v388, %v396
        %v405 = vsel %vm397, 1, 0
        %v406 = vsel %vm398, 1, 0
        %v407 = vsel %vm399, 1, 0
        %v408 = vsel %vm400, 1, 0
        %v409 = vsel %vm401, 1, 0
        %v410 = vsel %vm402, 1, 0
        %v411 = vsel %vm403, 1, 0
        %v412 = vsel %vm404, 1, 0
        %v413 = vcvt.s32.f32 %v405
        %v414 = vcvt.s32.f32 %v406
        %v415 = vcvt.s32.f32 %v407
        %v416 = vcvt.s32.f32 %v408
        %v417 = vcvt.s32.f32 %v409
        %v418 = vcvt.s32.f32 %v410
        %v419 = vcvt.s32.f32 %v411
        %v420 = vcvt.s32.f32 %v412
        %v421 = vpack.c.bf16 %v415, %v413
        %v422 = vpack.c.bf16 %v416, %v414
        %v423 = vpack.c.bf16 %v419, %v417
        %v424 = vpack.c.bf16 %v420, %v418
        %425 = vst [vmem:[#allocation2 + $0x30] sm:$0xff] %v421
        %426 = vst [vmem:[#allocation2 + $0x38] sm:$0xff] %v422
        %427 = vst [vmem:[#allocation2 + $0x40] sm:$0xff] %v423
        %428 = vst [vmem:[#allocation2 + $0x48] sm:$0xff] %v424
        %v429 = vlaneseq
        %v430 = vshrl.u32 %v429, 7
        %v431 = vsub.s32 4, %v430
        %v432 = vrot.slane %v310, %v431
        %v433 = vlaneseq
        %v434 = vshrl.u32 %v433, 7
        %v435 = vsub.s32 4, %v434
        %v436 = vrot.slane %v311, %v435
        %vm437 = vcmp.eq.s32.totalorder %v313, %v432
        %vm438 = vcmp.eq.s32.totalorder %v313, %v436
        %vm439 = vcmp.eq.s32.totalorder %v314, %v432
        %vm440 = vcmp.eq.s32.totalorder %v314, %v436
        %vm441 = vcmp.eq.s32.totalorder %v387, %v432
        %vm442 = vcmp.eq.s32.totalorder %v387, %v436
        %vm443 = vcmp.eq.s32.totalorder %v388, %v432
        %vm444 = vcmp.eq.s32.totalorder %v388, %v436
        %v445 = vsel %vm437, 1, 0
        %v446 = vsel %vm438, 1, 0
        %v447 = vsel %vm439, 1, 0
        %v448 = vsel %vm440, 1, 0
        %v449 = vsel %vm441, 1, 0
        %v450 = vsel %vm442, 1, 0
        %v451 = vsel %vm443, 1, 0
        %v452 = vsel %vm444, 1, 0
        %v453 = vcvt.s32.f32 %v445
        %v454 = vcvt.s32.f32 %v446
        %v455 = vcvt.s32.f32 %v447
        %v456 = vcvt.s32.f32 %v448
        %v457 = vcvt.s32.f32 %v449
        %v458 = vcvt.s32.f32 %v450
        %v459 = vcvt.s32.f32 %v451
        %v460 = vcvt.s32.f32 %v452
        %v461 = vpack.c.bf16 %v455, %v453
        %v462 = vpack.c.bf16 %v456, %v454
        %v463 = vpack.c.bf16 %v459, %v457
        %v464 = vpack.c.bf16 %v460, %v458
        %465 = vst [vmem:[#allocation2 + $0x50] sm:$0xff] %v461
        %466 = vst [vmem:[#allocation2 + $0x58] sm:$0xff] %v462
        %467 = vst [vmem:[#allocation2 + $0x60] sm:$0xff] %v463
        %468 = vst [vmem:[#allocation2 + $0x68] sm:$0xff] %v464
        %469 = vst [vmem:[#allocation2 + $0x70] sm:$0xff] 0
        %470 = vst [vmem:[#allocation2 + $0x78] sm:$0xff] 0
        %v471 = vld [vmem:[%s1] sm:$0xf]
        %v472 = vld [vmem:[%s1 + $0x8] sm:$0xf]
        %v473 = vld [vmem:[%s1 + $0x10] sm:$0xf]
        %v474 = vld [vmem:[%s1 + $0x18] sm:$0xf]
        %v475 = vld [vmem:[%s1 + $0x20] sm:$0xf]
        %v476 = vld [vmem:[%s1 + $0x28] sm:$0xf]
        %v477 = vld [vmem:[%s1 + $0x30] sm:$0xf]
        %v478 = vld [vmem:[%s1 + $0x38] sm:$0xf]
        %v479 = vld [vmem:[#allocation2] sm:$0xff]
        %v480 = vld [vmem:[#allocation2 + $0x8] sm:$0xff]
        %v481 = vld [vmem:[#allocation2 + $0x10] sm:$0xff]
        %v482 = vld [vmem:[#allocation2 + $0x18] sm:$0xff]
        %v483 = vld [vmem:[#allocation2 + $0x20] sm:$0xff]
        %v484 = vld [vmem:[#allocation2 + $0x28] sm:$0xff]
        %v485 = vld [vmem:[#allocation2 + $0x30] sm:$0xff]
        %v486 = vld [vmem:[#allocation2 + $0x38] sm:$0xff]
        %v487 = vld [vmem:[#allocation2 + $0x40] sm:$0xff]
        %v488 = vld [vmem:[#allocation2 + $0x48] sm:$0xff]
        %v489 = vld [vmem:[#allocation2 + $0x50] sm:$0xff]
        %v490 = vld [vmem:[#allocation2 + $0x58] sm:$0xff]
        %v491 = vld [vmem:[#allocation2 + $0x60] sm:$0xff]
        %v492 = vld [vmem:[#allocation2 + $0x68] sm:$0xff]
        %v493 = vld [vmem:[#allocation2 + $0x70] sm:$0xff]
        %v494 = vld [vmem:[#allocation2 + $0x78] sm:$0xff]
        %v495 = vlaneseq
        %v496 = vshrl.u32 %v495, 7
        %v497 = vsub.s32 5, %v496
        %v498 = vrot.slane %v310, %v497
        %v499 = vlaneseq
        %v500 = vshrl.u32 %v499, 7
        %v501 = vsub.s32 5, %v500
        %v502 = vrot.slane %v311, %v501
        %vm503 = vcmp.eq.s32.totalorder %v313, %v498
        %vm504 = vcmp.eq.s32.totalorder %v313, %v502
        %vm505 = vcmp.eq.s32.totalorder %v314, %v498
        %vm506 = vcmp.eq.s32.totalorder %v314, %v502
        %vm507 = vcmp.eq.s32.totalorder %v387, %v498
        %vm508 = vcmp.eq.s32.totalorder %v387, %v502
        %vm509 = vcmp.eq.s32.totalorder %v388, %v498
        %vm510 = vcmp.eq.s32.totalorder %v388, %v502
        %v511 = vsel %vm503, 1, 0
        %v512 = vsel %vm504, 1, 0
        %v513 = vsel %vm505, 1, 0
        %v514 = vsel %vm506, 1, 0
        %v515 = vsel %vm507, 1, 0
        %v516 = vsel %vm508, 1, 0
        %v517 = vsel %vm509, 1, 0
        %v518 = vsel %vm510, 1, 0
        %v519 = vcvt.s32.f32 %v511
        %v520 = vcvt.s32.f32 %v512
        %v521 = vcvt.s32.f32 %v513
        %v522 = vcvt.s32.f32 %v514
        %v523 = vcvt.s32.f32 %v515
        %v524 = vcvt.s32.f32 %v516
        %v525 = vcvt.s32.f32 %v517
        %v526 = vcvt.s32.f32 %v518
        %v527 = vpack.c.bf16 %v521, %v519
        %v528 = vpack.c.bf16 %v522, %v520
        %v529 = vpack.c.bf16 %v525, %v523
        %v530 = vpack.c.bf16 %v526, %v524
        %531 = vst [vmem:[#allocation2] sm:$0xff] %v527
        %532 = vst [vmem:[#allocation2 + $0x8] sm:$0xff] %v528
        %533 = vst [vmem:[#allocation2 + $0x10] sm:$0xff] %v529
        %534 = vst [vmem:[#allocation2 + $0x18] sm:$0xff] %v530
        %v535 = vlaneseq
        %v536 = vshrl.u32 %v535, 7
        %v537 = vsub.s32 6, %v536
        %v538 = vrot.slane %v310, %v537
        %v539 = vlaneseq
        %v540 = vshrl.u32 %v539, 7
        %v541 = vsub.s32 6, %v540
        %v542 = vrot.slane %v311, %v541
        %vm543 = vcmp.eq.s32.totalorder %v313, %v538
        %vm544 = vcmp.eq.s32.totalorder %v313, %v542
        %vm545 = vcmp.eq.s32.totalorder %v314, %v538
        %vm546 = vcmp.eq.s32.totalorder %v314, %v542
        %vm547 = vcmp.eq.s32.totalorder %v387, %v538
        %vm548 = vcmp.eq.s32.totalorder %v387, %v542
        %vm549 = vcmp.eq.s32.totalorder %v388, %v538
        %vm550 = vcmp.eq.s32.totalorder %v388, %v542
        %v551 = vsel %vm543, 1, 0
        %v552 = vsel %vm544, 1, 0
        %v553 = vsel %vm545, 1, 0
        %v554 = vsel %vm546, 1, 0
        %v555 = vsel %vm547, 1, 0
        %v556 = vsel %vm548, 1, 0
        %v557 = vsel %vm549, 1, 0
        %v558 = vsel %vm550, 1, 0
        %v559 = vcvt.s32.f32 %v551
        %v560 = vcvt.s32.f32 %v552
        %v561 = vcvt.s32.f32 %v553
        %v562 = vcvt.s32.f32 %v554
        %v563 = vcvt.s32.f32 %v555
        %v564 = vcvt.s32.f32 %v556
        %v565 = vcvt.s32.f32 %v557
        %v566 = vcvt.s32.f32 %v558
        %v567 = vpack.c.bf16 %v561, %v559
        %v568 = vpack.c.bf16 %v562, %v560
        %v569 = vpack.c.bf16 %v565, %v563
        %v570 = vpack.c.bf16 %v566, %v564
        %571 = vst [vmem:[#allocation2 + $0x20] sm:$0xff] %v567
        %572 = vst [vmem:[#allocation2 + $0x28] sm:$0xff] %v568
        %573 = vst [vmem:[#allocation2 + $0x30] sm:$0xff] %v569
        %574 = vst [vmem:[#allocation2 + $0x38] sm:$0xff] %v570
        %v575 = vlaneseq
        %v576 = vshrl.u32 %v575, 7
        %v577 = vsub.s32 7, %v576
        %v578 = vrot.slane %v310, %v577
        %v579 = vlaneseq
        %v580 = vshrl.u32 %v579, 7
        %v581 = vsub.s32 7, %v580
        %v582 = vrot.slane %v311, %v581
        %vm583 = vcmp.eq.s32.totalorder %v313, %v578
        %vm584 = vcmp.eq.s32.totalorder %v313, %v582
        %vm585 = vcmp.eq.s32.totalorder %v314, %v578
        %vm586 = vcmp.eq.s32.totalorder %v314, %v582
        %vm587 = vcmp.eq.s32.totalorder %v387, %v578
        %vm588 = vcmp.eq.s32.totalorder %v387, %v582
        %vm589 = vcmp.eq.s32.totalorder %v388, %v578
        %vm590 = vcmp.eq.s32.totalorder %v388, %v582
        %v591 = vsel %vm583, 1, 0
        %v592 = vsel %vm584, 1, 0
        %v593 = vsel %vm585, 1, 0
        %v594 = vsel %vm586, 1, 0
        %v595 = vsel %vm587, 1, 0
        %v596 = vsel %vm588, 1, 0
        %v597 = vsel %vm589, 1, 0
        %v598 = vsel %vm590, 1, 0
        %v599 = vcvt.s32.f32 %v591
        %v600 = vcvt.s32.f32 %v592
        %v601 = vcvt.s32.f32 %v593
        %v602 = vcvt.s32.f32 %v594
        %v603 = vcvt.s32.f32 %v595
        %v604 = vcvt.s32.f32 %v596
        %v605 = vcvt.s32.f32 %v597
        %v606 = vcvt.s32.f32 %v598
        %v607 = vpack.c.bf16 %v601, %v599
        %v608 = vpack.c.bf16 %v602, %v600
        %v609 = vpack.c.bf16 %v605, %v603
        %v610 = vpack.c.bf16 %v606, %v604
        %611 = vst [vmem:[#allocation2 + $0x40] sm:$0xff] %v607
        %612 = vst [vmem:[#allocation2 + $0x48] sm:$0xff] %v608
        %613 = vst [vmem:[#allocation2 + $0x50] sm:$0xff] %v609
        %614 = vst [vmem:[#allocation2 + $0x58] sm:$0xff] %v610
        %615 = vst [vmem:[#allocation2 + $0x60] sm:$0xff] 0
        %616 = vst [vmem:[#allocation2 + $0x68] sm:$0xff] 0
        %617 = vst [vmem:[#allocation2 + $0x70] sm:$0xff] 0
        %618 = vst [vmem:[#allocation2 + $0x78] sm:$0xff] 0
        %v619 = vld [vmem:[%s1 + $0x4] sm:$0xf]
        %v620 = vld [vmem:[%s1 + $0xc] sm:$0xf]
        %v621 = vld [vmem:[%s1 + $0x14] sm:$0xf]
        %v622 = vld [vmem:[%s1 + $0x1c] sm:$0xf]
        %v623 = vld [vmem:[%s1 + $0x24] sm:$0xf]
        %v624 = vld [vmem:[%s1 + $0x2c] sm:$0xf]
        %v625 = vld [vmem:[%s1 + $0x34] sm:$0xf]
        %v626 = vld [vmem:[%s1 + $0x3c] sm:$0xf]
        %v627 = vld [vmem:[#allocation2] sm:$0xff]
        %v628 = vld [vmem:[#allocation2 + $0x8] sm:$0xff]
        %v629 = vld [vmem:[#allocation2 + $0x10] sm:$0xff]
        %v630 = vld [vmem:[#allocation2 + $0x18] sm:$0xff]
        %v631 = vld [vmem:[#allocation2 + $0x20] sm:$0xff]
        %v632 = vld [vmem:[#allocation2 + $0x28] sm:$0xff]
        %v633 = vld [vmem:[#allocation2 + $0x30] sm:$0xff]
        %v634 = vld [vmem:[#allocation2 + $0x38] sm:$0xff]
        %v635 = vld [vmem:[#allocation2 + $0x40] sm:$0xff]
        %v636 = vld [vmem:[#allocation2 + $0x48] sm:$0xff]
        %v637 = vld [vmem:[#allocation2 + $0x50] sm:$0xff]
        %v638 = vld [vmem:[#allocation2 + $0x58] sm:$0xff]
        %v639 = vld [vmem:[#allocation2 + $0x60] sm:$0xff]
        %v640 = vld [vmem:[#allocation2 + $0x68] sm:$0xff]
        %v641 = vld [vmem:[#allocation2 + $0x70] sm:$0xff]
        %v642 = vld [vmem:[#allocation2 + $0x78] sm:$0xff]
        %v651 = vunpack.c.l.b16 %v619
        %v652 = vunpack.c.l.b16 %v620
        %v653 = vunpack.c.l.b16 %v621
        %v654 = vunpack.c.l.b16 %v622
        %v655 = vunpack.c.l.b16 %v623
        %v656 = vunpack.c.l.b16 %v624
        %v657 = vunpack.c.l.b16 %v625
        %v658 = vunpack.c.l.b16 %v626
        %v659 = vpack.c.b16 %v652, %v651
        %v660 = vpack.c.b16 %v654, %v653
        %v661 = vpack.c.b16 %v656, %v655
        %v662 = vpack.c.b16 %v658, %v657
        %667 = vmatprep.subr.bf16.mxu0 %v628
        %668 = vmatpush1.bf16.msra.mxu0 %v627
        %669 = vmatprep.subr.bf16.mxu0 %v630
        %670 = vmatpush1.bf16.msra.mxu0 %v629
        %671 = vmatprep.subr.bf16.mxu0 %v632
        %672 = vmatpush1.bf16.msra.mxu0 %v631
        %673 = vmatprep.subr.bf16.mxu0 %v634
        %674 = vmatpush1.bf16.msra.mxu0 %v633
        %675 = vmatprep.subr.bf16.mxu0 %v636
        %676 = vmatpush1.bf16.msra.mxu0 %v635
        %677 = vmatprep.subr.bf16.mxu0 %v638
        %678 = vmatpush1.bf16.msra.mxu0 %v637
        %679 = vmatprep.subr.bf16.mxu0 %v640
        %680 = vmatpush1.bf16.msra.mxu0 %v639
        %681 = vmatprep.subr.bf16.mxu0 %v642
        %682 = vmatpush1.bf16.msra.mxu0 %v641
        %683 = vmatprep.subr.bf16.mxu0 0
        %684 = vmatpush1.bf16.msra.mxu0 0
        %685 = vmatprep.subr.bf16.mxu0 0
        %686 = vmatpush1.bf16.msra.mxu0 0
        %687 = vmatprep.subr.bf16.mxu0 0
        %688 = vmatpush1.bf16.msra.mxu0 0
        %689 = vmatprep.subr.bf16.mxu0 0
        %690 = vmatpush1.bf16.msra.mxu0 0
        %691 = vmatprep.subr.bf16.mxu0 0
        %692 = vmatpush1.bf16.msra.mxu0 0
        %693 = vmatprep.subr.bf16.mxu0 0
        %694 = vmatpush1.bf16.msra.mxu0 0
        %695 = vmatprep.subr.bf16.mxu0 0
        %696 = vmatpush1.bf16.msra.mxu0 0
        %697 = vmatprep.subr.bf16.mxu0 0
        %698 = vmatpush1.bf16.msra.mxu0 0
        %699 = vmatprep.mubr.bf16.mxu0 0
        %700 = vmatmul.mubr.bf16.gmra.mrb[0].mxu0 %v659
        %v701 = vpop.f32.mrb[0].mxu0
        %v702 = vadd.f32 0.0, %v701
        %v703 = vpop.f32.mrb[0].mxu0
        %v704 = vadd.f32 0.0, %v703
        %v705 = vpop.f32.mrb[0].mxu0
        %v706 = vadd.f32 0.0, %v705
        %v707 = vpop.f32.mrb[0].mxu0
        %v708 = vadd.f32 0.0, %v707
        %709 = vmatprep.mubr.bf16.mxu0 0
        %710 = vmatmul.mubr.bf16.gmra.mrb[0].mxu0 %v660
        %v711 = vpop.f32.mrb[0].mxu0
        %v712 = vadd.f32 0.0, %v711
        %v713 = vpop.f32.mrb[0].mxu0
        %v714 = vadd.f32 0.0, %v713
        %v715 = vpop.f32.mrb[0].mxu0
        %v716 = vadd.f32 0.0, %v715
        %v717 = vpop.f32.mrb[0].mxu0
        %v718 = vadd.f32 0.0, %v717
        %719 = vmatprep.mubr.bf16.mxu0 0
        %720 = vmatmul.mubr.bf16.gmra.mrb[0].mxu0 %v661
        %v721 = vpop.f32.mrb[0].mxu0
        %v722 = vadd.f32 0.0, %v721
        %v723 = vpop.f32.mrb[0].mxu0
        %v724 = vadd.f32 0.0, %v723
        %v725 = vpop.f32.mrb[0].mxu0
        %v726 = vadd.f32 0.0, %v725
        %v727 = vpop.f32.mrb[0].mxu0
        %v728 = vadd.f32 0.0, %v727
        %729 = vmatprep.mubr.bf16.mxu0 0
        %730 = vmatmul.mubr.bf16.gmra.mrb[0].mxu0 %v662
        %v731 = vpop.f32.mrb[0].mxu0
        %v732 = vadd.f32 0.0, %v731
        %v733 = vpop.f32.mrb[0].mxu0
        %v734 = vadd.f32 0.0, %v733
        %v735 = vpop.f32.mrb[0].mxu0
        %v736 = vadd.f32 0.0, %v735
        %v737 = vpop.f32.mrb[0].mxu0
        %v738 = vadd.f32 0.0, %v737
        %739 = vdwg.mxu0
        %v748 = vunpack.c.l.b16 %v471
        %v749 = vunpack.c.l.b16 %v472
        %v750 = vunpack.c.l.b16 %v473
        %v751 = vunpack.c.l.b16 %v474
        %v752 = vunpack.c.l.b16 %v475
        %v753 = vunpack.c.l.b16 %v476
        %v754 = vunpack.c.l.b16 %v477
        %v755 = vunpack.c.l.b16 %v478
        %v756 = vpack.c.b16 %v749, %v748
        %v757 = vpack.c.b16 %v751, %v750
        %v758 = vpack.c.b16 %v753, %v752
        %v759 = vpack.c.b16 %v755, %v754
        %764 = vmatprep.subr.bf16.mxu0 %v480
        %765 = vmatpush1.bf16.msra.mxu0 %v479
        %766 = vmatprep.subr.bf16.mxu0 %v482
        %767 = vmatpush1.bf16.msra.mxu0 %v481
        %768 = vmatprep.subr.bf16.mxu0 %v484
        %769 = vmatpush1.bf16.msra.mxu0 %v483
        %770 = vmatprep.subr.bf16.mxu0 %v486
        %771 = vmatpush1.bf16.msra.mxu0 %v485
        %772 = vmatprep.subr.bf16.mxu0 %v488
        %773 = vmatpush1.bf16.msra.mxu0 %v487
        %774 = vmatprep.subr.bf16.mxu0 %v490
        %775 = vmatpush1.bf16.msra.mxu0 %v489
        %776 = vmatprep.subr.bf16.mxu0 %v492
        %777 = vmatpush1.bf16.msra.mxu0 %v491
        %778 = vmatprep.subr.bf16.mxu0 %v494
        %779 = vmatpush1.bf16.msra.mxu0 %v493
        %780 = vmatprep.subr.bf16.mxu0 0
        %781 = vmatpush1.bf16.msra.mxu0 0
        %782 = vmatprep.subr.bf16.mxu0 0
        %783 = vmatpush1.bf16.msra.mxu0 0
        %784 = vmatprep.subr.bf16.mxu0 0
        %785 = vmatpush1.bf16.msra.mxu0 0
        %786 = vmatprep.subr.bf16.mxu0 0
        %787 = vmatpush1.bf16.msra.mxu0 0
        %788 = vmatprep.subr.bf16.mxu0 0
        %789 = vmatpush1.bf16.msra.mxu0 0
        %790 = vmatprep.subr.bf16.mxu0 0
        %791 = vmatpush1.bf16.msra.mxu0 0
        %792 = vmatprep.subr.bf16.mxu0 0
        %793 = vmatpush1.bf16.msra.mxu0 0
        %794 = vmatprep.subr.bf16.mxu0 0
        %795 = vmatpush1.bf16.msra.mxu0 0
        %796 = vmatprep.mubr.bf16.mxu0 0
        %797 = vmatmul.mubr.bf16.gmra.mrb[0].mxu0 %v756
        %v798 = vpop.f32.mrb[0].mxu0
        %v799 = vadd.f32 %v702, %v798
        %v800 = vpop.f32.mrb[0].mxu0
        %v801 = vadd.f32 %v704, %v800
        %v802 = vpop.f32.mrb[0].mxu0
        %v803 = vadd.f32 %v706, %v802
        %v804 = vpop.f32.mrb[0].mxu0
        %v805 = vadd.f32 %v708, %v804
        %806 = vmatprep.mubr.bf16.mxu0 0
        %807 = vmatmul.mubr.bf16.gmra.mrb[0].mxu0 %v757
        %v808 = vpop.f32.mrb[0].mxu0
        %v809 = vadd.f32 %v712, %v808
        %v810 = vpop.f32.mrb[0].mxu0
        %v811 = vadd.f32 %v714, %v810
        %v812 = vpop.f32.mrb[0].mxu0
        %v813 = vadd.f32 %v716, %v812
        %v814 = vpop.f32.mrb[0].mxu0
        %v815 = vadd.f32 %v718, %v814
        %816 = vmatprep.mubr.bf16.mxu0 0
        %817 = vmatmul.mubr.bf16.gmra.mrb[0].mxu0 %v758
        %v818 = vpop.f32.mrb[0].mxu0
        %v819 = vadd.f32 %v722, %v818
        %v820 = vpop.f32.mrb[0].mxu0
        %v821 = vadd.f32 %v724, %v820
        %v822 = vpop.f32.mrb[0].mxu0
        %v823 = vadd.f32 %v726, %v822
        %v824 = vpop.f32.mrb[0].mxu0
        %v825 = vadd.f32 %v728, %v824
        %826 = vmatprep.mubr.bf16.mxu0 0
        %827 = vmatmul.mubr.bf16.gmra.mrb[0].mxu0 %v759
        %v828 = vpop.f32.mrb[0].mxu0
        %v829 = vadd.f32 %v732, %v828
        %v830 = vpop.f32.mrb[0].mxu0
        %v831 = vadd.f32 %v734, %v830
        %v832 = vpop.f32.mrb[0].mxu0
        %v833 = vadd.f32 %v736, %v832
        %v834 = vpop.f32.mrb[0].mxu0
        %v835 = vadd.f32 %v738, %v834
        %836 = vdwg.mxu0
        %v837 = vmul.f32 %v799, %v799
        %v838 = vmul.f32 %v801, %v801
        %v839 = vmul.f32 %v803, %v803
        %v840 = vmul.f32 %v805, %v805
        %v841 = vmul.f32 %v809, %v809
        %v842 = vmul.f32 %v811, %v811
        %v843 = vmul.f32 %v813, %v813
        %v844 = vmul.f32 %v815, %v815
        %v845 = vsub.f32 %v837, %v819
        %v846 = vsub.f32 %v838, %v821
        %v847 = vsub.f32 %v839, %v823
        %v848 = vsub.f32 %v840, %v825
        %v849 = vsub.f32 %v841, %v829
        %v850 = vsub.f32 %v842, %v831
        %v851 = vsub.f32 %v843, %v833
        %v852 = vsub.f32 %v844, %v835
        %v853 = vmul.f32 %v845, 0.5
        %v854 = vmul.f32 %v846, 0.5
        %v855 = vmul.f32 %v847, 0.5
        %v856 = vmul.f32 %v848, 0.5
        %v857 = vmul.f32 %v849, 0.5
        %v858 = vmul.f32 %v850, 0.5
        %v859 = vmul.f32 %v851, 0.5
        %v860 = vmul.f32 %v852, 0.5
        %v861 = vpack.c.bf16 %v855, %v853
        %v862 = vpack.c.bf16 %v856, %v854
        %v863 = vpack.c.bf16 %v859, %v857
        %v864 = vpack.c.bf16 %v860, %v858
        %v865 = vld [vmem:[%s2] sm:$0xf]
        %v866 = vld [vmem:[%s2 + $0x4] sm:$0xf]
        %v867 = vld [vmem:[%s2 + $0x8] sm:$0xf]
        %v868 = vld [vmem:[%s2 + $0xc] sm:$0xf]
        %v869 = vld [vmem:[%s2 + $0x10] sm:$0xf]
        %v870 = vld [vmem:[%s2 + $0x14] sm:$0xf]
        %v871 = vld [vmem:[%s2 + $0x18] sm:$0xf]
        %v872 = vld [vmem:[%s2 + $0x1c] sm:$0xf]
        %v873 = vld [vmem:[%s3] sm:$0xff]
        %v874 = vld [vmem:[%s3 + $0x8] sm:$0xff]
        %v875 = vld [vmem:[%s3 + $0x10] sm:$0xff]
        %v876 = vld [vmem:[%s3 + $0x18] sm:$0xff]
        %v877 = vld [vmem:[%s3 + $0x20] sm:$0xff]
        %v878 = vld [vmem:[%s3 + $0x28] sm:$0xff]
        %v879 = vld [vmem:[%s3 + $0x30] sm:$0xff]
        %v880 = vld [vmem:[%s3 + $0x38] sm:$0xff]
        %882 = vset.pattern.permute.xlu0 0
        %883 = vperm.xlu0 %882, %v873
        %v884 = vpop.permute.xlu0 %883
        %887 = vset.pattern.permute.xlu0 0
        %888 = vperm.xlu0 %887, %v874
        %v889 = vpop.permute.xlu0 %888
        %892 = vset.pattern.permute.xlu0 0
        %893 = vperm.xlu0 %892, %v875
        %v894 = vpop.permute.xlu0 %893
        %897 = vset.pattern.permute.xlu0 0
        %898 = vperm.xlu0 %897, %v876
        %v899 = vpop.permute.xlu0 %898
        %902 = vset.pattern.permute.xlu0 0
        %903 = vperm.xlu0 %902, %v877
        %v904 = vpop.permute.xlu0 %903
        %907 = vset.pattern.permute.xlu0 0
        %908 = vperm.xlu0 %907, %v878
        %v909 = vpop.permute.xlu0 %908
        %912 = vset.pattern.permute.xlu0 0
        %913 = vperm.xlu0 %912, %v879
        %v914 = vpop.permute.xlu0 %913
        %917 = vset.pattern.permute.xlu0 0
        %918 = vperm.xlu0 %917, %v880
        %v919 = vpop.permute.xlu0 %918
        %v929 = vunpack.c.l.b16 %v865
        %v930 = vunpack.c.l.b16 %v866
        %v931 = vunpack.c.l.b16 %v867
        %v932 = vunpack.c.l.b16 %v868
        %v933 = vunpack.c.l.b16 %v869
        %v934 = vunpack.c.l.b16 %v870
        %v935 = vunpack.c.l.b16 %v871
        %v936 = vunpack.c.l.b16 %v872
        %v937 = vpack.c.b16 %v930, %v929
        %v938 = vpack.c.b16 %v932, %v931
        %v939 = vpack.c.b16 %v934, %v933
        %v940 = vpack.c.b16 %v936, %v935
        %vm941 = vcmask 261120
        %v943 = vsel %vm941, %v937, 0
        %v946 = vsel %vm941, %v938, 0
        %v949 = vsel %vm941, %v939, 0
        %v952 = vsel %vm941, %v940, 0
        %954 = vmatprep.subr.bf16.mxu0 %v862
        %955 = vmatpush1.bf16.msra.mxu0 %v861
        %956 = vmatprep.subr.bf16.mxu0 %v864
        %957 = vmatpush1.bf16.msra.mxu0 %v863
        %958 = vmatprep.subr.bf16.mxu0 0
        %959 = vmatpush1.bf16.msra.mxu0 0
        %960 = vmatprep.subr.bf16.mxu0 0
        %961 = vmatpush1.bf16.msra.mxu0 0
        %962 = vmatprep.subr.bf16.mxu0 0
        %963 = vmatpush1.bf16.msra.mxu0 0
        %964 = vmatprep.subr.bf16.mxu0 0
        %965 = vmatpush1.bf16.msra.mxu0 0
        %966 = vmatprep.subr.bf16.mxu0 0
        %967 = vmatpush1.bf16.msra.mxu0 0
        %968 = vmatprep.subr.bf16.mxu0 0
        %969 = vmatpush1.bf16.msra.mxu0 0
        %970 = vmatprep.subr.bf16.mxu0 0
        %971 = vmatpush1.bf16.msra.mxu0 0
        %972 = vmatprep.subr.bf16.mxu0 0
        %973 = vmatpush1.bf16.msra.mxu0 0
        %974 = vmatprep.subr.bf16.mxu0 0
        %975 = vmatpush1.bf16.msra.mxu0 0
        %976 = vmatprep.subr.bf16.mxu0 0
        %977 = vmatpush1.bf16.msra.mxu0 0
        %978 = vmatprep.subr.bf16.mxu0 0
        %979 = vmatpush1.bf16.msra.mxu0 0
        %980 = vmatprep.subr.bf16.mxu0 0
        %981 = vmatpush1.bf16.msra.mxu0 0
        %982 = vmatprep.subr.bf16.mxu0 0
        %983 = vmatpush1.bf16.msra.mxu0 0
        %984 = vmatprep.subr.bf16.mxu0 0
        %985 = vmatpush1.bf16.msra.mxu0 0
        %986 = vmatprep.mubr.bf16.mxu0 0
        %987 = vmatmul.mubr.bf16.gmra.mrb[0].mxu0 %v943
        %v988 = vpop.f32.mrb[0].mxu0
        %v989 = vadd.f32 %v884, %v988
        %v990 = vpop.f32.mrb[0].mxu0
        %v991 = vadd.f32 %v884, %v990
        %v992 = vpop.f32.mrb[0].mxu0
        %v993 = vadd.f32 %v889, %v992
        %v994 = vpop.f32.mrb[0].mxu0
        %v995 = vadd.f32 %v889, %v994
        %996 = vmatprep.mubr.bf16.mxu0 0
        %997 = vmatmul.mubr.bf16.gmra.mrb[0].mxu0 %v946
        %v998 = vpop.f32.mrb[0].mxu0
        %v999 = vadd.f32 %v894, %v998
        %v1000 = vpop.f32.mrb[0].mxu0
        %v1001 = vadd.f32 %v894, %v1000
        %v1002 = vpop.f32.mrb[0].mxu0
        %v1003 = vadd.f32 %v899, %v1002
        %v1004 = vpop.f32.mrb[0].mxu0
        %v1005 = vadd.f32 %v899, %v1004
        %1006 = vmatprep.mubr.bf16.mxu0 0
        %1007 = vmatmul.mubr.bf16.gmra.mrb[0].mxu0 %v949
        %v1008 = vpop.f32.mrb[0].mxu0
        %v1009 = vadd.f32 %v904, %v1008
        %v1010 = vpop.f32.mrb[0].mxu0
        %v1011 = vadd.f32 %v904, %v1010
        %v1012 = vpop.f32.mrb[0].mxu0
        %v1013 = vadd.f32 %v909, %v1012
        %v1014 = vpop.f32.mrb[0].mxu0
        %v1015 = vadd.f32 %v909, %v1014
        %1016 = vmatprep.mubr.bf16.mxu0 0
        %1017 = vmatmul.mubr.bf16.gmra.mrb[0].mxu0 %v952
        %v1018 = vpop.f32.mrb[0].mxu0
        %v1019 = vadd.f32 %v914, %v1018
        %v1020 = vpop.f32.mrb[0].mxu0
        %v1021 = vadd.f32 %v914, %v1020
        %v1022 = vpop.f32.mrb[0].mxu0
        %v1023 = vadd.f32 %v919, %v1022
        %v1024 = vpop.f32.mrb[0].mxu0
        %v1025 = vadd.f32 %v919, %v1024
        %1026 = vdwg.mxu0
        %v1027 = vmax.f32 %v989, 0.0
        %v1028 = vmax.f32 %v991, 0.0
        %v1029 = vmax.f32 %v993, 0.0
        %v1030 = vmax.f32 %v995, 0.0
        %v1031 = vmax.f32 %v999, 0.0
        %v1032 = vmax.f32 %v1001, 0.0
        %v1033 = vmax.f32 %v1003, 0.0
        %v1034 = vmax.f32 %v1005, 0.0
        %v1035 = vmax.f32 %v1009, 0.0
        %v1036 = vmax.f32 %v1011, 0.0
        %v1037 = vmax.f32 %v1013, 0.0
        %v1038 = vmax.f32 %v1015, 0.0
        %v1039 = vmax.f32 %v1019, 0.0
        %v1040 = vmax.f32 %v1021, 0.0
        %v1041 = vmax.f32 %v1023, 0.0
        %v1042 = vmax.f32 %v1025, 0.0
        %v1043 = vld [vmem:[%s4] sm:$0xf]
        %v1044 = vld [vmem:[%s4 + $0x4] sm:$0xf]
        %v1045 = vld [vmem:[%s4 + $0x8] sm:$0xf]
        %v1046 = vld [vmem:[%s4 + $0xc] sm:$0xf]
        %v1047 = vpack.c.bf16 %v1029, %v1027
        %v1048 = vpack.c.bf16 %v1030, %v1028
        %v1049 = vpack.c.bf16 %v1033, %v1031
        %v1050 = vpack.c.bf16 %v1034, %v1032
        %v1051 = vpack.c.bf16 %v1037, %v1035
        %v1052 = vpack.c.bf16 %v1038, %v1036
        %v1053 = vpack.c.bf16 %v1041, %v1039
        %v1054 = vpack.c.bf16 %v1042, %v1040
        %v1055 = vld [vmem:[%s5] sm:$0xff]
        %v1056 = vld [vmem:[%s5 + $0x8] sm:$0xff]
        %v1057 = vld [vmem:[%s5 + $0x10] sm:$0xff]
        %v1058 = vld [vmem:[%s5 + $0x18] sm:$0xff]
        %1060 = vset.pattern.permute.xlu0 0
        %1061 = vperm.xlu0 %1060, %v1055
        %v1062 = vpop.permute.xlu0 %1061
        %1065 = vset.pattern.permute.xlu0 0
        %1066 = vperm.xlu0 %1065, %v1056
        %v1067 = vpop.permute.xlu0 %1066
        %1070 = vset.pattern.permute.xlu0 0
        %1071 = vperm.xlu0 %1070, %v1057
        %v1072 = vpop.permute.xlu0 %1071
        %1075 = vset.pattern.permute.xlu0 0
        %1076 = vperm.xlu0 %1075, %v1058
        %v1077 = vpop.permute.xlu0 %1076
        %v1083 = vunpack.c.l.b16 %v1043
        %v1084 = vunpack.c.l.b16 %v1044
        %v1085 = vunpack.c.l.b16 %v1045
        %v1086 = vunpack.c.l.b16 %v1046
        %v1087 = vpack.c.b16 %v1084, %v1083
        %v1088 = vpack.c.b16 %v1086, %v1085
        %vm1089 = vcmask 523264
        %v1091 = vsel %vm1089, %v1087, 0
        %v1094 = vsel %vm1089, %v1088, 0
        %1096 = vmatprep.subr.bf16.mxu0 %v1048
        %1097 = vmatpush1.bf16.msra.mxu0 %v1047
        %1098 = vmatprep.subr.bf16.mxu0 %v1050
        %1099 = vmatpush1.bf16.msra.mxu0 %v1049
        %1100 = vmatprep.subr.bf16.mxu0 %v1052
        %1101 = vmatpush1.bf16.msra.mxu0 %v1051
        %1102 = vmatprep.subr.bf16.mxu0 %v1054
        %1103 = vmatpush1.bf16.msra.mxu0 %v1053
        %1104 = vmatprep.subr.bf16.mxu0 0
        %1105 = vmatpush1.bf16.msra.mxu0 0
        %1106 = vmatprep.subr.bf16.mxu0 0
        %1107 = vmatpush1.bf16.msra.mxu0 0
        %1108 = vmatprep.subr.bf16.mxu0 0
        %1109 = vmatpush1.bf16.msra.mxu0 0
        %1110 = vmatprep.subr.bf16.mxu0 0
        %1111 = vmatpush1.bf16.msra.mxu0 0
        %1112 = vmatprep.subr.bf16.mxu0 0
        %1113 = vmatpush1.bf16.msra.mxu0 0
        %1114 = vmatprep.subr.bf16.mxu0 0
        %1115 = vmatpush1.bf16.msra.mxu0 0
        %1116 = vmatprep.subr.bf16.mxu0 0
        %1117 = vmatpush1.bf16.msra.mxu0 0
        %1118 = vmatprep.subr.bf16.mxu0 0
        %1119 = vmatpush1.bf16.msra.mxu0 0
        %1120 = vmatprep.subr.bf16.mxu0 0
        %1121 = vmatpush1.bf16.msra.mxu0 0
        %1122 = vmatprep.subr.bf16.mxu0 0
        %1123 = vmatpush1.bf16.msra.mxu0 0
        %1124 = vmatprep.subr.bf16.mxu0 0
        %1125 = vmatpush1.bf16.msra.mxu0 0
        %1126 = vmatprep.subr.bf16.mxu0 0
        %1127 = vmatpush1.bf16.msra.mxu0 0
        %1128 = vmatprep.mubr.bf16.mxu0 0
        %1129 = vmatmul.mubr.bf16.gmra.mrb[0].mxu0 %v1091
        %v1130 = vpop.f32.mrb[0].mxu0
        %v1131 = vadd.f32 %v1062, %v1130
        %v1132 = vpop.f32.mrb[0].mxu0
        %v1133 = vadd.f32 %v1062, %v1132
        %v1134 = vpop.f32.mrb[0].mxu0
        %v1135 = vadd.f32 %v1067, %v1134
        %v1136 = vpop.f32.mrb[0].mxu0
        %v1137 = vadd.f32 %v1067, %v1136
        %1138 = vmatprep.mubr.bf16.mxu0 0
        %1139 = vmatmul.mubr.bf16.gmra.mrb[0].mxu0 %v1094
        %v1140 = vpop.f32.mrb[0].mxu0
        %v1141 = vadd.f32 %v1072, %v1140
        %v1142 = vpop.f32.mrb[0].mxu0
        %v1143 = vadd.f32 %v1072, %v1142
        %v1144 = vpop.f32.mrb[0].mxu0
        %v1145 = vadd.f32 %v1077, %v1144
        %v1146 = vpop.f32.mrb[0].mxu0
        %v1147 = vadd.f32 %v1077, %v1146
        %1148 = vdwg.mxu0
        %v1149 = vmax.f32 %v1131, 0.0
        %v1150 = vmax.f32 %v1133, 0.0
        %v1151 = vmax.f32 %v1135, 0.0
        %v1152 = vmax.f32 %v1137, 0.0
        %v1153 = vmax.f32 %v1141, 0.0
        %v1154 = vmax.f32 %v1143, 0.0
        %v1155 = vmax.f32 %v1145, 0.0
        %v1156 = vmax.f32 %v1147, 0.0
        %v1157 = vld [vmem:[%s6] sm:$0xff]
        %v1158 = vld [vmem:[%s6 + $0x8] sm:$0xff]
        %v1159 = vld [vmem:[%s6 + $0x10] sm:$0xff]
        %v1160 = vld [vmem:[%s6 + $0x18] sm:$0xff]
        %1162 = vset.pattern.permute.xlu0 0
        %1163 = vperm.xlu0 %1162, %v1157
        %v1164 = vpop.permute.xlu0 %1163
        %1167 = vset.pattern.permute.xlu0 0
        %1168 = vperm.xlu0 %1167, %v1158
        %v1169 = vpop.permute.xlu0 %1168
        %1172 = vset.pattern.permute.xlu0 0
        %1173 = vperm.xlu0 %1172, %v1159
        %v1174 = vpop.permute.xlu0 %1173
        %1177 = vset.pattern.permute.xlu0 0
        %1178 = vperm.xlu0 %1177, %v1160
        %v1179 = vpop.permute.xlu0 %1178
        %v1181 = vmul.f32 %v1164, %v1149
        %v1182 = vmul.f32 %v1164, %v1150
        %v1183 = vmul.f32 %v1169, %v1151
        %v1184 = vmul.f32 %v1169, %v1152
        %v1185 = vmul.f32 %v1174, %v1153
        %v1186 = vmul.f32 %v1174, %v1154
        %v1187 = vmul.f32 %v1179, %v1155
        %v1188 = vmul.f32 %v1179, %v1156
        %v1189 = vadd.f32 %v1181, %v1183
        %v1190 = vadd.f32 %v1189, %v1185
        %v1191 = vadd.f32 %v1190, %v1187
        %v1192 = vrot.slane %v1191, 4
        %v1193 = vadd.f32 %v1191, %v1192
        %v1194 = vrot.slane %v1193, 2
        %v1195 = vadd.f32 %v1193, %v1194
        %v1196 = vrot.slane %v1195, 1
        %v1197 = vadd.f32 %v1195, %v1196
        %v1198 = vadd.f32 %v1182, %v1184
        %v1199 = vadd.f32 %v1198, %v1186
        %v1200 = vadd.f32 %v1199, %v1188
        %v1201 = vrot.slane %v1200, 4
        %v1202 = vadd.f32 %v1200, %v1201
        %v1203 = vrot.slane %v1202, 2
        %v1204 = vadd.f32 %v1202, %v1203
        %v1205 = vrot.slane %v1204, 1
        %v1206 = vadd.f32 %v1204, %v1205
        %v1207 = vld [vmem:[#allocation3] sm:$0x1]
        %1209 = vset.pattern.permute.xlu0 0
        %1210 = vperm.xlu0 %1209, %v1207
        %v1211 = vpop.permute.xlu0 %1210
        %v1213 = vlaneseq
        %v1214 = vshrl.u32 %v1213, 7
        %v1215 = vsub.s32 0, %v1214
        %v1216 = vrot.slane %v1211, %v1215
        %v1217 = vadd.f32 %v1197, %v1216
        %v1218 = vadd.f32 %v1206, %v1216
        %v1219 = vxor.u32 %v1217, 2147483648
        %v1220 = vxor.u32 %v1218, 2147483648
        %v1221 = vmul.f32 %v1219, 1.442695
        %v1222 = vpow.pop %v1221
        %v1223 = vmul.f32 %v1220, 1.442695
        %v1224 = vpow.pop %v1223
        %v1225 = vadd.f32 %v1222, 1.0
        %v1226 = vadd.f32 %v1224, 1.0
        %v1227 = vrcp.pop %v1225
        %v1228 = vmul.f32 1.0, %v1227
        %v1229 = vrcp.pop %v1226
        %v1230 = vmul.f32 1.0, %v1229
        %v1233 = vcombine.low %v1228, %v1230
        %v1235 = vunpack.c.l.s4 1966171168
        %v1236 = vunpack.c.0.s8 %v1235
        %v1237 = vlaneseq
        %v1238 = vshrl.u32 %v1237, 7
        %v1239 = vsub.s32 %v1236, %v1238
        %v1240 = vrot.slane %v1233, %v1239
        %v1242 = vunpack.c.l.s4 1966171168
        %v1243 = vunpack.c.0.s8 %v1242
        %v1244 = vlaneseq
        %v1245 = vshrl.u32 %v1244, 7
        %v1246 = vsub.s32 %v1243, %v1245
        %v1247 = vrot.slane %v1240, %v1246
        %v1249 = vlaneseq
        %vm1250 = vcmp.ge.s32.totalorder %v1249, 0
        %vm1251 = vcmp.lt.s32.totalorder %v1249, 256
        %vm1252 = vmand %vm1250, %vm1251
        %1253 = vst.msk [vmem:[%s301] sm:$0x3] %vm1252, %v1247
        %s1254 = sand.u32 %s205, 1
        %s1255 = scalar_lea.sflag [#allocation5], %s1254
        %s1256 = sand.u32 %s205, 1
        %s1257 = smul.addr %s1256, 2
        %s1258 = scalar_lea.vmem [#allocation4], %s1257
        // Predicated region
        $region53: #{tpu_custom_call.1} parent=51 // pred_check
          %p1259 = pneg %p215
        $region54: #{tpu_custom_call.1} parent=51 // pred_check_branch
          %1261 = sbr.rel (%p1259) target = $region56
        $region55: #{tpu_custom_call.1} parent=51 // pred_region
          %s1262 = smul.u32 2, %s24
          %s1264 = ssub.s32 32, 32
          %1265 = vsyncadd %s1255, %s1264
          %s1266 = smul.addr %s1262, 16
          %s1267 = scalar_lea.hbm %s8, %s1266
          %s1269 = sshll.u32 %s1258, 4
          %s1270 = int_to_ptr.vmem [resolvable:$true] %s1269
          %1272 = dma.vmem_to_hbm [thread:$0]  %s1270, 32, %s1267, %s1255
        $region56: #{tpu_custom_call.1} parent=51 // pred_fallthru
          _
      $region52: #{tpu_custom_call.1} parent=5 // pred_fallthru
        _
      %p1273 = scmp.le.s32.totalorder 2, %s19
      // Predicated region
      $region57: #{tpu_custom_call.1} parent=5 // pred_check
        %p1274 = pneg %p1273
      $region58: #{tpu_custom_call.1} parent=5 // pred_check_branch
        %1276 = sbr.rel (%p1274) target = $region60
      $region59: #{tpu_custom_call.1} parent=5 // pred_region
        %s1277 = ssub.s32 %s19, 2
        // Predicated region
        $region61: #{tpu_custom_call.1} parent=59 // pred_check
          %p1278 = pneg %p221
        $region62: #{tpu_custom_call.1} parent=59 // pred_check_branch
          %1280 = sbr.rel (%p1278) target = $region64
        $region63: #{tpu_custom_call.1} parent=59 // pred_region
          %s1281 = sand.u32 %s206, 1
          %s1282 = scalar_lea.sflag [#allocation5], %s1281
          %s1283 = sand.u32 %s206, 1
          %s1284 = smul.addr %s1283, 2
          %s1285 = scalar_lea.vmem [#allocation4], %s1284
          %1286 = dma.done %s1282, 32
        $region64: #{tpu_custom_call.1} parent=59 // pred_fallthru
          _
      $region60: #{tpu_custom_call.1} parent=5 // pred_fallthru
        _
    $region6: #{tpu_custom_call.1} parent=1 // loop_footer
      %s23 = sadd.s32 1, %s19
    $region7: #{tpu_custom_call.1} parent=1 // loop_footer_branch
      %18 = sbr.rel target = $region3
    $region8: #{tpu_custom_call.1} parent=1 // loop_exit
      _
    %1287 = vsyncpa [#allocation5], 1
    %s1288 = scalar_lea.sflag [#allocation5], 1
    %1289 = vsyncpa %s1288, 1

</llo_original>
